<compile_context>
chip_gen: v7x
topology: tpu7x:2x2x1
jax: 0.10.0
libtpu: 0.0.40
codegen_flags: <defaults>
</compile_context>

<pallas_src>
import functools
import re

import jax
import jax.numpy as jnp
from jax import lax
from jax.experimental import pallas as pl
from jax.experimental.pallas import tpu as pltpu


def _round_up(x: int, m: int) -> int:
    return ((x + m - 1) // m) * m


def _pad_2d(a, rows: int, cols: int):
    out = jnp.zeros((rows, cols), jnp.float32)
    return out.at[: a.shape[0], : a.shape[1]].set(a.astype(jnp.float32))


def _tpu_generation() -> int:
    try:
        kind = jax.devices()[0].device_kind.lower()
    except Exception:
        return 0
    m = re.search(r"v(\d+)", kind)
    return int(m.group(1)) if m else 0


def _vmem_limit_bytes() -> int:
    cap = None
    try:
        info = pltpu.get_tpu_info()
        cap = int(getattr(info, "vmem_capacity_bytes", 0)) or None
    except Exception:
        cap = None
    if cap is None:
        cap = 64 * 1024 * 1024  # conservative: v7x per-TensorCore physical VMEM
    return max(32 * 1024 * 1024, int(cap * 0.85))


def _pad_dim(d: int, gran: int) -> int:
    # Lane padding: multiples of 128. For tiny dims on 256x256-MXU chips (v6e/v7x)
    # pad to 256 so each matmul pass fills a full MXU tile; v5e MXU is 128x128.
    if d < 256 and gran >= 256:
        return _round_up(d, 256)
    return _round_up(d, 128)


# ----------------------------------------------------------------------------
# Fused kernel: all MLP layers + projection for one batch tile.
# ----------------------------------------------------------------------------
def _fused_mlp_kernel(x_ref, w0_ref, wr_ref, b_ref, g_ref, bt_ref, wp_ref, bp_ref,
                      o_ref, *scratch, n_layers: int, d_model: int,
                      activation: str, eps: float,
                      stream_k0: bool, k0_pad: int, k0_tile: int):
    def act(y):
        if activation == "relu":
            return jnp.maximum(y, 0.0)
        # TODO(synk): PyTorch nn.GELU default is exact erf; tanh approx used here.
        return jax.nn.gelu(y, approximate=True)

    inv_d = jnp.float32(1.0 / d_model)

    # ---- layer-0 matmul: resident weight, or streamed over K0 chunks -------
    if stream_k0:
        w0_buf, sem, acc0 = scratch
        n_chunks = k0_pad // k0_tile

        def fetch(t, slot):
            pltpu.make_async_copy(
                w0_ref.at[pl.ds(t * k0_tile, k0_tile), :],
                w0_buf.at[slot], sem.at[slot]).start()

        fetch(0, 0)
        acc0[...] = jnp.zeros_like(acc0)
        # Static unroll: chunk count known at trace time; all slices/slots static.
        for t in range(n_chunks):
            slot = t & 1
            pltpu.make_async_copy(
                w0_ref.at[pl.ds(t * k0_tile, k0_tile), :],
                w0_buf.at[slot], sem.at[slot]).wait()
            if t + 1 < n_chunks:
                fetch(t + 1, 1 - slot)
            xs = x_ref[:, pl.ds(t * k0_tile, k0_tile)]
            acc0[...] += jnp.dot(xs, w0_buf[slot],
                                 preferred_element_type=jnp.float32)
        y = acc0[...]
    else:
        y = jnp.dot(x_ref[...], w0_ref[...], preferred_element_type=jnp.float32)

    h = None
    for l in range(n_layers):  # static unroll: activations stay in vregs/VMEM
        if l > 0:
            y = jnp.dot(h, wr_ref[l - 1], preferred_element_type=jnp.float32)
        y = y + b_ref[pl.ds(l, 1), :]
        y = act(y)
        # LayerNorm over the real d_model lanes, single-pass variance.
        # Padded lanes of y are exactly 0 (padded weight cols / bias are 0 and
        # act(0)==0), so unmasked sums over the padded width are already correct.
        mean = jnp.sum(y, axis=-1, keepdims=True) * inv_d
        ex2 = jnp.sum(y * y, axis=-1, keepdims=True) * inv_d
        var = jnp.maximum(ex2 - mean * mean, 0.0)
        yn = (y - mean) * lax.rsqrt(var + eps)
        # gamma padded with 0 -> padded lanes of h stay exactly 0 for the next layer.
        h_f32 = yn * g_ref[pl.ds(l, 1), :] + bt_ref[pl.ds(l, 1), :]
        h = h_f32.astype(jnp.bfloat16)

    out = jnp.dot(h, wp_ref[...], preferred_element_type=jnp.float32) + bp_ref[...]
    o_ref[...] = out.astype(o_ref.dtype)


# ----------------------------------------------------------------------------
# Model wrapper
# ----------------------------------------------------------------------------
class PallasMLPModel:
    """JAX/Pallas re-implementation of the PyTorch `Model` (inference)."""

    # Stream layer-0 weight from HBM when its bf16 footprint exceeds this.
    _W0_RESIDENT_LIMIT = 6 * 1024 * 1024

    def __init__(self, *, seq_len, pred_len, enc_in, c_out, d_model, e_layers,
                 activation="relu", output_attention=False, key=None,
                 k0_tile=1024, force_stream_k0=False):
        if activation not in ("relu", "gelu"):
            # Padded-lane-stays-zero LayerNorm trick requires act(0) == 0.
            raise ValueError(f"unsupported activation: {activation}")

        self.seq_len = seq_len
        self.pred_len = pred_len
        self.input_features = enc_in
        self.output_features = c_out
        self.d_model = d_model
        self.layers = e_layers
        self.activation = activation
        self.output_attention = output_attention

        if key is None:
            key = jax.random.PRNGKey(0)

        # ---- chip-dependent knobs (queried once) ---------------------------
        gen = _tpu_generation()
        self._num_tc = 2 if gen >= 7 else 1          # v7x: 2 TensorCores / chip
        self._mxu_gran = 256 if gen >= 6 else 128     # v6e/v7x MXU tile is 256x256
        self._vmem_limit = _vmem_limit_bytes()

        # ---- raw (unpadded, f32) parameters -------------------------------
        self.params = []
        in_size = enc_in * seq_len
        for i in range(e_layers):
            isz = in_size if i == 0 else d_model
            key, kw, kb = jax.random.split(key, 3)
            bound = 1.0 / jnp.sqrt(isz)
            w = jax.random.uniform(kw, (isz, d_model), jnp.float32, -bound, bound)
            b = jax.random.uniform(kb, (d_model,), jnp.float32, -bound, bound)
            gamma = jnp.ones((d_model,), jnp.float32)
            beta = jnp.zeros((d_model,), jnp.float32)
            self.params.append((w, b, gamma, beta))

        proj_out = c_out * pred_len
        key, kw, kb = jax.random.split(key, 3)
        bound = 1.0 / jnp.sqrt(d_model)
        self.proj_w = jax.random.uniform(kw, (d_model, proj_out), jnp.float32,
                                         -bound, bound)
        self.proj_b = jax.random.uniform(kb, (proj_out,), jnp.float32,
                                         -bound, bound)

        # ---- padded / stacked kernel-side parameters (hoisted: done ONCE) ---
        gran = self._mxu_gran
        K0 = in_size
        self._K0 = K0
        self._Pout = proj_out
        self._Dp = _pad_dim(d_model, gran)
        self._Pp = _pad_dim(proj_out, gran)
        self._K0p = _pad_dim(K0, gran)
        Dp, Pp = self._Dp, self._Pp

        # Layer-0 weight streaming decision (removes VMEM ceiling on seq_len*enc_in).
        self._stream_k0 = bool(force_stream_k0) or \
            (self._K0p * Dp * 2 > self._W0_RESIDENT_LIMIT)
        self._k0_tile = None
        if self._stream_k0:
            kt = min(int(k0_tile), self._K0p)
            kt = max(128, (kt // 128) * 128)
            self._K0p = _round_up(self._K0p, kt)   # make chunk count exact
            self._k0_tile = kt
        K0p = self._K0p

        w0, _, _, _ = self.params[0]
        self._w0 = _pad_2d(w0, K0p, Dp).astype(jnp.bfloat16)             # (K0p, Dp)

        if e_layers > 1:
            wr = [_pad_2d(self.params[i][0], Dp, Dp) for i in range(1, e_layers)]
            self._wr = jnp.stack(wr, axis=0).astype(jnp.bfloat16)        # (L-1,Dp,Dp)
        else:
            # Tiny dummy (never read) instead of a dead (1, Dp, Dp) VMEM block.
            self._wr = jnp.zeros((1, 8, 128), jnp.bfloat16)

        def stack_vec(idx):
            rows = [jnp.zeros((Dp,), jnp.float32).at[:d_model].set(self.params[i][idx])
                    for i in range(e_layers)]
            return jnp.stack(rows, axis=0)                                # (L, Dp)

        self._b = stack_vec(1)
        self._g = stack_vec(2)     # padded lanes of gamma are 0 -> padded acts stay 0
        self._bt = stack_vec(3)

        self._wp = _pad_2d(self.proj_w, Dp, Pp).astype(jnp.bfloat16)      # (Dp, Pp)
        self._bp = jnp.zeros((1, Pp), jnp.float32).at[0, :proj_out].set(self.proj_b)

    # ------------------------------------------------------------------
    def _choose_tb(self, B: int) -> int:
        if self._num_tc >= 2 and B >= 32:
            # Ensure >= 2 grid steps so the "parallel" axis shards across both TCs.
            tb = min(128, _round_up(pl.cdiv(B, 2), 16))
        else:
            cap = 128 if self._num_tc >= 2 else 256   # bigger tiles on 1-TC chips
            tb = min(cap, _round_up(max(B, 1), 16))
        # Keep the (double-buffered) bf16 x tile bounded when K0 is very long.
        while tb > 16 and tb * self._K0p * 2 > 8 * 1024 * 1024:
            tb //= 2
        return max(16, _round_up(tb, 16))

    # ------------------------------------------------------------------
    def _forward_flat(self, x_flat):
        """x_flat: (B, seq_len*enc_in) f32 -> (B, pred_len*c_out) f32."""
        B = x_flat.shape[0]
        K0p, Dp, Pp = self._K0p, self._Dp, self._Pp
        L = self.layers
        stream = self._stream_k0
        k0_tile = self._k0_tile if stream else K0p

        TB = self._choose_tb(B)
        Bp = _round_up(B, TB)
        nb = Bp // TB

        # Pad input (zeros in padded K lanes / batch rows), cast to bf16 for the MXU.
        xp = jnp.zeros((Bp, K0p), jnp.float32).at[:B, :self._K0].set(x_flat)
        xp = xp.astype(jnp.bfloat16)

        kernel = functools.partial(
            _fused_mlp_kernel, n_layers=L, d_model=self.d_model,
            activation=self.activation, eps=1e-5,
            stream_k0=stream, k0_pad=K0p, k0_tile=k0_tile)

        flops = 2 * Bp * (K0p * Dp + (L - 1) * Dp * Dp + Dp * Pp)
        transc = Bp * Dp * L if self.activation == "gelu" else 0
        w_res_bytes = ((0 if stream else K0p * Dp * 2)
                       + (L - 1) * Dp * Dp * 2 + 3 * L * Dp * 4 + Dp * Pp * 2 + Pp * 4)
        bytes_accessed = (Bp * K0p * 2 + Bp * Pp * 4 + w_res_bytes
                          + (nb * K0p * Dp * 2 if stream else 0))

        def _const_spec(block_shape, single_buffer):
            zeros = (0,) * len(block_shape)
            kwargs = {"pipeline_mode": pl.Buffered(1)} if single_buffer else {}
            return pl.BlockSpec(block_shape, lambda *_: zeros, **kwargs)

        def build_and_run(single_buffer):
            if stream:
                w0_spec = pl.BlockSpec(memory_space=pl.ANY)   # stays in HBM
                scratch = [pltpu.VMEM((2, k0_tile, Dp), jnp.bfloat16),
                           pltpu.SemaphoreType.DMA((2,)),
                           pltpu.VMEM((TB, Dp), jnp.float32)]
            else:
                w0_spec = _const_spec((K0p, Dp), single_buffer)
                scratch = []
            in_specs = [
                pl.BlockSpec((TB, K0p), lambda i: (i, 0)),                # x tile
                w0_spec,                                                   # layer-0 W
                _const_spec(self._wr.shape, single_buffer),                # other Ws
                _const_spec((L, Dp), single_buffer),                       # biases
                _const_spec((L, Dp), single_buffer),                       # gammas
                _const_spec((L, Dp), single_buffer),                       # betas
                _const_spec((Dp, Pp), single_buffer),                      # proj W
                _const_spec((1, Pp), single_buffer),                       # proj bias
            ]
            return pl.pallas_call(
                kernel,
                out_shape=jax.ShapeDtypeStruct((Bp, Pp), jnp.float32),
                grid=(nb,),
                in_specs=in_specs,
                out_specs=pl.BlockSpec((TB, Pp), lambda i: (i, 0)),
                scratch_shapes=scratch,
                compiler_params=pltpu.CompilerParams(
                    dimension_semantics=("parallel",),
                    vmem_limit_bytes=self._vmem_limit,
                ),
                cost_estimate=pl.CostEstimate(
                    flops=flops,
                    transcendentals=transc,
                    bytes_accessed=bytes_accessed,
                ),
            )(xp, self._w0, self._wr, self._b, self._g, self._bt, self._wp, self._bp)

        try:
            out_p = build_and_run(True)
        except Exception:
            # Fallback if this JAX build rejects single-buffered (Buffered(1)) blocks.
            out_p = build_and_run(False)

        return out_p[:B, :self._Pout]

    # ------------------------------------------------------------------
    def __call__(self, x):
        # x: (B, seq_len, enc_in) -> flatten -> fused stack -> (B, pred_len, c_out)
        B = x.shape[0]
        flat = x.reshape(B, -1).astype(jnp.float32)
        out = self._forward_flat(flat)
        out = out.reshape(B, self.pred_len, self.output_features)
        if self.output_attention:
            return out, None
        return out


# ----------------------------------------------------------------------------
# Demo
# ----------------------------------------------------------------------------
if __name__ == "__main__":
    key = jax.random.PRNGKey(0)

    def reference(model, x):
        # Pure-JAX reference mirroring the kernel math (bf16 matmul inputs, f32 accum).
        B = x.shape[0]
        h = x.reshape(B, -1).astype(jnp.bfloat16)
        for (w, b, g, beta) in model.params:
            y = jnp.dot(h, w.astype(jnp.bfloat16),
                        preferred_element_type=jnp.float32) + b
            y = jnp.maximum(y, 0.0)
            m = jnp.mean(y, axis=-1, keepdims=True)
            v = jnp.mean((y - m) ** 2, axis=-1, keepdims=True)
            h32 = (y - m) * jax.lax.rsqrt(v + 1e-5) * g + beta
            h = h32.astype(jnp.bfloat16)
        out = jnp.dot(h, model.proj_w.astype(jnp.bfloat16),
                      preferred_element_type=jnp.float32) + model.proj_b
        return out.reshape(B, model.pred_len, model.output_features)

    # --- case 1: small config, VMEM-resident layer-0 weight --------------------
    B, seq_len, enc_in = 2, 8, 4
    pred_len, c_out = 8, 4
    d_model, e_layers = 32, 2

    model = PallasMLPModel(seq_len=seq_len, pred_len=pred_len, enc_in=enc_in,
                           c_out=c_out, d_model=d_model, e_layers=e_layers,
                           activation="relu", output_attention=False,
                           key=jax.random.PRNGKey(42))
    x = jax.random.normal(key, (B, seq_len, enc_in), jnp.float32)
    out = jax.block_until_ready(model(x))
    assert out.shape == (B, pred_len, c_out), out.shape
    ref = reference(model, x)
    assert jnp.allclose(out, ref, atol=2e-2, rtol=2e-2), \
        float(jnp.max(jnp.abs(out - ref)))

    # --- case 2: exercise the streamed layer-0 path (K0 chunked via manual DMA) --
    B2, seq_len2, enc_in2 = 4, 16, 16     # K0 = 256 -> two 128-wide chunks
    model2 = PallasMLPModel(seq_len=seq_len2, pred_len=pred_len, enc_in=enc_in2,
                            c_out=c_out, d_model=d_model, e_layers=1,
                            activation="relu", key=jax.random.PRNGKey(7),
                            force_stream_k0=True, k0_tile=128)
    x2 = jax.random.normal(jax.random.PRNGKey(1), (B2, seq_len2, enc_in2), jnp.float32)
    out2 = jax.block_until_ready(model2(x2))
    assert out2.shape == (B2, pred_len, c_out), out2.shape
    ref2 = reference(model2, x2)
    assert jnp.allclose(out2, ref2, atol=2e-2, rtol=2e-2), \
        float(jnp.max(jnp.abs(out2 - ref2)))

    print("KERNEL_OK")
</pallas_src>

<mosaic_0001>
module attributes {stable_mosaic.version = 11 : i64} {
  func.func @_fused_mlp_kernel(%arg0: i32, %arg1: memref<16x128xbf16, #tpu.memory_space<vmem>>, %arg2: memref<128x128xbf16, #tpu.memory_space<vmem>>, %arg3: memref<1x128x128xbf16, #tpu.memory_space<vmem>>, %arg4: memref<2x128xf32, #tpu.memory_space<vmem>>, %arg5: memref<2x128xf32, #tpu.memory_space<vmem>>, %arg6: memref<2x128xf32, #tpu.memory_space<vmem>>, %arg7: memref<128x128xbf16, #tpu.memory_space<vmem>>, %arg8: memref<1x128xf32, #tpu.memory_space<vmem>>, %arg9: memref<16x128xf32, #tpu.memory_space<vmem>>) attributes {dimension_semantics = [#tpu.dimension_semantics<parallel>], iteration_bounds = array<i64: 1>, scalar_prefetch = 0 : i64, scratch_operands = 0 : i64, tpu.core_type = #tpu.core_type<tc>, window_params = [{transform_indices = @transform_0, window_bounds = array<i64: 16, 128>}, {pipeline_mode = #tpu.pipeline_mode<synchronous>, transform_indices = @transform_1, window_bounds = array<i64: 128, 128>}, {pipeline_mode = #tpu.pipeline_mode<synchronous>, transform_indices = @transform_2, window_bounds = array<i64: 1, 128, 128>}, {pipeline_mode = #tpu.pipeline_mode<synchronous>, transform_indices = @transform_3, window_bounds = array<i64: 2, 128>}, {pipeline_mode = #tpu.pipeline_mode<synchronous>, transform_indices = @transform_4, window_bounds = array<i64: 2, 128>}, {pipeline_mode = #tpu.pipeline_mode<synchronous>, transform_indices = @transform_5, window_bounds = array<i64: 2, 128>}, {pipeline_mode = #tpu.pipeline_mode<synchronous>, transform_indices = @transform_6, window_bounds = array<i64: 128, 128>}, {pipeline_mode = #tpu.pipeline_mode<synchronous>, transform_indices = @transform_7, window_bounds = array<i64: 1, 128>}, {transform_indices = @transform_8, window_bounds = array<i64: 16, 128>}]} {
    %c0 = arith.constant 0 : index
    %c0_0 = arith.constant 0 : index
    %0 = vector.load %arg1[%c0, %c0_0] : memref<16x128xbf16, #tpu.memory_space<vmem>>, vector<16x128xbf16>
    %c0_1 = arith.constant 0 : index
    %c0_2 = arith.constant 0 : index
    %1 = vector.load %arg2[%c0_1, %c0_2] : memref<128x128xbf16, #tpu.memory_space<vmem>>, vector<128x128xbf16>
    %cst = arith.constant dense<0.000000e+00> : vector<16x128xf32>
    %2 = tpu.matmul %0, %1, %cst {dimension_numbers = #tpu.dot_dimension_numbers<[1], [0], [0], [1], [0, 0, 1, 1], [], []>} : vector<16x128xbf16>, vector<128x128xbf16>, vector<16x128xf32> -> vector<16x128xf32>
    %c0_3 = arith.constant 0 : index
    %c0_4 = arith.constant 0 : index
    %3 = vector.load %arg4[%c0_3, %c0_4] : memref<2x128xf32, #tpu.memory_space<vmem>>, vector<1x128xf32>
    %4 = vector.broadcast %3 : vector<1x128xf32> to vector<16x128xf32>
    %5 = arith.addf %2, %4 : vector<16x128xf32>
    %cst_5 = arith.constant 0.000000e+00 : f32
    %6 = vector.broadcast %cst_5 : f32 to vector<16x128xf32>
    %7 = arith.maximumf %5, %6 : vector<16x128xf32>
    %cst_6 = arith.constant dense<0.000000e+00> : vector<16xf32>
    %8 = vector.multi_reduction <add>, %7, %cst_6 [1] : vector<16x128xf32> to vector<16xf32>
    %9 = vector.shape_cast %8 : vector<16xf32> to vector<16x1xf32>
    %cst_7 = arith.constant 3.125000e-02 : f32
    %10 = vector.broadcast %cst_7 : f32 to vector<16x1xf32>
    %11 = arith.mulf %9, %10 : vector<16x1xf32>
    %12 = arith.mulf %7, %7 : vector<16x128xf32>
    %cst_8 = arith.constant dense<0.000000e+00> : vector<16xf32>
    %13 = vector.multi_reduction <add>, %12, %cst_8 [1] : vector<16x128xf32> to vector<16xf32>
    %14 = vector.shape_cast %13 : vector<16xf32> to vector<16x1xf32>
    %cst_9 = arith.constant 3.125000e-02 : f32
    %15 = vector.broadcast %cst_9 : f32 to vector<16x1xf32>
    %16 = arith.mulf %14, %15 : vector<16x1xf32>
    %17 = arith.mulf %11, %11 : vector<16x1xf32>
    %18 = arith.subf %16, %17 : vector<16x1xf32>
    %cst_10 = arith.constant 0.000000e+00 : f32
    %19 = vector.broadcast %cst_10 : f32 to vector<16x1xf32>
    %20 = arith.maximumf %18, %19 : vector<16x1xf32>
    %21 = vector.broadcast %11 : vector<16x1xf32> to vector<16x128xf32>
    %22 = arith.subf %7, %21 : vector<16x128xf32>
    %cst_11 = arith.constant 9.99999974E-6 : f32
    %23 = vector.broadcast %cst_11 : f32 to vector<16x1xf32>
    %24 = arith.addf %20, %23 : vector<16x1xf32>
    %25 = math.rsqrt %24 : vector<16x1xf32>
    %26 = vector.broadcast %25 : vector<16x1xf32> to vector<16x128xf32>
    %27 = arith.mulf %22, %26 : vector<16x128xf32>
    %c0_12 = arith.constant 0 : index
    %c0_13 = arith.constant 0 : index
    %28 = vector.load %arg5[%c0_12, %c0_13] : memref<2x128xf32, #tpu.memory_space<vmem>>, vector<1x128xf32>
    %29 = vector.broadcast %28 : vector<1x128xf32> to vector<16x128xf32>
    %30 = arith.mulf %27, %29 : vector<16x128xf32>
    %c0_14 = arith.constant 0 : index
    %c0_15 = arith.constant 0 : index
    %31 = vector.load %arg6[%c0_14, %c0_15] : memref<2x128xf32, #tpu.memory_space<vmem>>, vector<1x128xf32>
    %32 = vector.broadcast %31 : vector<1x128xf32> to vector<16x128xf32>
    %33 = arith.addf %30, %32 : vector<16x128xf32>
    %34 = arith.truncf %33 : vector<16x128xf32> to vector<16x128xbf16>
    %c0_16 = arith.constant 0 : index
    %c0_17 = arith.constant 0 : index
    %c0_18 = arith.constant 0 : index
    %35 = vector.load %arg3[%c0_16, %c0_17, %c0_18] : memref<1x128x128xbf16, #tpu.memory_space<vmem>>, vector<1x128x128xbf16>
    %36 = vector.shape_cast %35 : vector<1x128x128xbf16> to vector<128x128xbf16>
    %cst_19 = arith.constant dense<0.000000e+00> : vector<16x128xf32>
    %37 = tpu.matmul %34, %36, %cst_19 {dimension_numbers = #tpu.dot_dimension_numbers<[1], [0], [0], [1], [0, 0, 1, 1], [], []>} : vector<16x128xbf16>, vector<128x128xbf16>, vector<16x128xf32> -> vector<16x128xf32>
    %c1 = arith.constant 1 : index
    %c0_20 = arith.constant 0 : index
    %38 = vector.load %arg4[%c1, %c0_20] : memref<2x128xf32, #tpu.memory_space<vmem>>, vector<1x128xf32>
    %39 = vector.broadcast %38 : vector<1x128xf32> to vector<16x128xf32>
    %40 = arith.addf %37, %39 : vector<16x128xf32>
    %cst_21 = arith.constant 0.000000e+00 : f32
    %41 = vector.broadcast %cst_21 : f32 to vector<16x128xf32>
    %42 = arith.maximumf %40, %41 : vector<16x128xf32>
    %cst_22 = arith.constant dense<0.000000e+00> : vector<16xf32>
    %43 = vector.multi_reduction <add>, %42, %cst_22 [1] : vector<16x128xf32> to vector<16xf32>
    %44 = vector.shape_cast %43 : vector<16xf32> to vector<16x1xf32>
    %cst_23 = arith.constant 3.125000e-02 : f32
    %45 = vector.broadcast %cst_23 : f32 to vector<16x1xf32>
    %46 = arith.mulf %44, %45 : vector<16x1xf32>
    %47 = arith.mulf %42, %42 : vector<16x128xf32>
    %cst_24 = arith.constant dense<0.000000e+00> : vector<16xf32>
    %48 = vector.multi_reduction <add>, %47, %cst_24 [1] : vector<16x128xf32> to vector<16xf32>
    %49 = vector.shape_cast %48 : vector<16xf32> to vector<16x1xf32>
    %cst_25 = arith.constant 3.125000e-02 : f32
    %50 = vector.broadcast %cst_25 : f32 to vector<16x1xf32>
    %51 = arith.mulf %49, %50 : vector<16x1xf32>
    %52 = arith.mulf %46, %46 : vector<16x1xf32>
    %53 = arith.subf %51, %52 : vector<16x1xf32>
    %cst_26 = arith.constant 0.000000e+00 : f32
    %54 = vector.broadcast %cst_26 : f32 to vector<16x1xf32>
    %55 = arith.maximumf %53, %54 : vector<16x1xf32>
    %56 = vector.broadcast %46 : vector<16x1xf32> to vector<16x128xf32>
    %57 = arith.subf %42, %56 : vector<16x128xf32>
    %cst_27 = arith.constant 9.99999974E-6 : f32
    %58 = vector.broadcast %cst_27 : f32 to vector<16x1xf32>
    %59 = arith.addf %55, %58 : vector<16x1xf32>
    %60 = math.rsqrt %59 : vector<16x1xf32>
    %61 = vector.broadcast %60 : vector<16x1xf32> to vector<16x128xf32>
    %62 = arith.mulf %57, %61 : vector<16x128xf32>
    %c1_28 = arith.constant 1 : index
    %c0_29 = arith.constant 0 : index
    %63 = vector.load %arg5[%c1_28, %c0_29] : memref<2x128xf32, #tpu.memory_space<vmem>>, vector<1x128xf32>
    %64 = vector.broadcast %63 : vector<1x128xf32> to vector<16x128xf32>
    %65 = arith.mulf %62, %64 : vector<16x128xf32>
    %c1_30 = arith.constant 1 : index
    %c0_31 = arith.constant 0 : index
    %66 = vector.load %arg6[%c1_30, %c0_31] : memref<2x128xf32, #tpu.memory_space<vmem>>, vector<1x128xf32>
    %67 = vector.broadcast %66 : vector<1x128xf32> to vector<16x128xf32>
    %68 = arith.addf %65, %67 : vector<16x128xf32>
    %69 = arith.truncf %68 : vector<16x128xf32> to vector<16x128xbf16>
    %c0_32 = arith.constant 0 : index
    %c0_33 = arith.constant 0 : index
    %70 = vector.load %arg7[%c0_32, %c0_33] : memref<128x128xbf16, #tpu.memory_space<vmem>>, vector<128x128xbf16>
    %cst_34 = arith.constant dense<0.000000e+00> : vector<16x128xf32>
    %71 = tpu.matmul %69, %70, %cst_34 {dimension_numbers = #tpu.dot_dimension_numbers<[1], [0], [0], [1], [0, 0, 1, 1], [], []>} : vector<16x128xbf16>, vector<128x128xbf16>, vector<16x128xf32> -> vector<16x128xf32>
    %c0_35 = arith.constant 0 : index
    %c0_36 = arith.constant 0 : index
    %72 = vector.load %arg8[%c0_35, %c0_36] : memref<1x128xf32, #tpu.memory_space<vmem>>, vector<1x128xf32>
    %73 = vector.broadcast %72 : vector<1x128xf32> to vector<16x128xf32>
    %74 = arith.addf %71, %73 : vector<16x128xf32>
    %c0_37 = arith.constant 0 : index
    %c0_38 = arith.constant 0 : index
    %75 = vector.load %arg9[%c0_37, %c0_38] : memref<16x128xf32, #tpu.memory_space<vmem>>, vector<16x128xf32>
    tpu.vector_store %arg9[%c0_37, %c0_38], %74 {strides = array<i32>} : memref<16x128xf32, #tpu.memory_space<vmem>>, vector<16x128xf32>,
    return
  }
  func.func @transform_0(%arg0: i32) -> (i32, i32) {
    %c0_i32 = arith.constant 0 : i32
    %c0_i32_0 = arith.constant 0 : i32
    return %arg0, %c0_i32 : i32, i32
  }
  func.func @transform_1(%arg0: i32) -> (i32, i32) {
    %c0_i32 = arith.constant 0 : i32
    %c0_i32_0 = arith.constant 0 : i32
    %c0_i32_1 = arith.constant 0 : i32
    return %c0_i32, %c0_i32_0 : i32, i32
  }
  func.func @transform_2(%arg0: i32) -> (i32, i32, i32) {
    %c0_i32 = arith.constant 0 : i32
    %c0_i32_0 = arith.constant 0 : i32
    %c0_i32_1 = arith.constant 0 : i32
    %c0_i32_2 = arith.constant 0 : i32
    return %c0_i32, %c0_i32_0, %c0_i32_1 : i32, i32, i32
  }
  func.func @transform_3(%arg0: i32) -> (i32, i32) {
    %c0_i32 = arith.constant 0 : i32
    %c0_i32_0 = arith.constant 0 : i32
    %c0_i32_1 = arith.constant 0 : i32
    return %c0_i32, %c0_i32_0 : i32, i32
  }
  func.func @transform_4(%arg0: i32) -> (i32, i32) {
    %c0_i32 = arith.constant 0 : i32
    %c0_i32_0 = arith.constant 0 : i32
    %c0_i32_1 = arith.constant 0 : i32
    return %c0_i32, %c0_i32_0 : i32, i32
  }
  func.func @transform_5(%arg0: i32) -> (i32, i32) {
    %c0_i32 = arith.constant 0 : i32
    %c0_i32_0 = arith.constant 0 : i32
    %c0_i32_1 = arith.constant 0 : i32
    return %c0_i32, %c0_i32_0 : i32, i32
  }
  func.func @transform_6(%arg0: i32) -> (i32, i32) {
    %c0_i32 = arith.constant 0 : i32
    %c0_i32_0 = arith.constant 0 : i32
    %c0_i32_1 = arith.constant 0 : i32
    return %c0_i32, %c0_i32_0 : i32, i32
  }
  func.func @transform_7(%arg0: i32) -> (i32, i32) {
    %c0_i32 = arith.constant 0 : i32
    %c0_i32_0 = arith.constant 0 : i32
    %c0_i32_1 = arith.constant 0 : i32
    return %c0_i32, %c0_i32_0 : i32, i32
  }
  func.func @transform_8(%arg0: i32) -> (i32, i32) {
    %c0_i32 = arith.constant 0 : i32
    %c0_i32_0 = arith.constant 0 : i32
    return %arg0, %c0_i32 : i32, i32
  }
}

module attributes {stable_mosaic.version = 11 : i64} {
  func.func @_fused_mlp_kernel(%arg0: i32, %arg1: memref<16x128xbf16, #tpu.memory_space<vmem>>, %arg2: memref<128x128xbf16, #tpu.memory_space<vmem>>, %arg3: memref<1x128x128xbf16, #tpu.memory_space<vmem>>, %arg4: memref<2x128xf32, #tpu.memory_space<vmem>>, %arg5: memref<2x128xf32, #tpu.memory_space<vmem>>, %arg6: memref<2x128xf32, #tpu.memory_space<vmem>>, %arg7: memref<128x128xbf16, #tpu.memory_space<vmem>>, %arg8: memref<1x128xf32, #tpu.memory_space<vmem>>, %arg9: memref<16x128xf32, #tpu.memory_space<vmem>>) attributes {dimension_semantics = [#tpu.dimension_semantics<parallel>], iteration_bounds = array<i64: 1>, scalar_prefetch = 0 : i64, scratch_operands = 0 : i64, tpu.core_type = #tpu.core_type<tc>, window_params = [{transform_indices = @transform_0, window_bounds = array<i64: 16, 128>}, {pipeline_mode = #tpu.pipeline_mode<synchronous>, transform_indices = @transform_1, window_bounds = array<i64: 128, 128>}, {pipeline_mode = #tpu.pipeline_mode<synchronous>, transform_indices = @transform_2, window_bounds = array<i64: 1, 128, 128>}, {pipeline_mode = #tpu.pipeline_mode<synchronous>, transform_indices = @transform_3, window_bounds = array<i64: 2, 128>}, {pipeline_mode = #tpu.pipeline_mode<synchronous>, transform_indices = @transform_4, window_bounds = array<i64: 2, 128>}, {pipeline_mode = #tpu.pipeline_mode<synchronous>, transform_indices = @transform_5, window_bounds = array<i64: 2, 128>}, {pipeline_mode = #tpu.pipeline_mode<synchronous>, transform_indices = @transform_6, window_bounds = array<i64: 128, 128>}, {pipeline_mode = #tpu.pipeline_mode<synchronous>, transform_indices = @transform_7, window_bounds = array<i64: 1, 128>}, {transform_indices = @transform_8, window_bounds = array<i64: 16, 128>}]} {
    %c0 = arith.constant 0 : index
    %c0_0 = arith.constant 0 : index
    %0 = vector.load %arg1[%c0, %c0_0] : memref<16x128xbf16, #tpu.memory_space<vmem>>, vector<16x128xbf16>
    %c0_1 = arith.constant 0 : index
    %c0_2 = arith.constant 0 : index
    %1 = vector.load %arg2[%c0_1, %c0_2] : memref<128x128xbf16, #tpu.memory_space<vmem>>, vector<128x128xbf16>
    %cst = arith.constant dense<0.000000e+00> : vector<16x128xf32>
    %2 = tpu.matmul %0, %1, %cst {dimension_numbers = #tpu.dot_dimension_numbers<[1], [0], [0], [1], [0, 0, 1, 1], [], []>} : vector<16x128xbf16>, vector<128x128xbf16>, vector<16x128xf32> -> vector<16x128xf32>
    %c0_3 = arith.constant 0 : index
    %c0_4 = arith.constant 0 : index
    %3 = vector.load %arg4[%c0_3, %c0_4] : memref<2x128xf32, #tpu.memory_space<vmem>>, vector<1x128xf32>
    %4 = vector.broadcast %3 : vector<1x128xf32> to vector<16x128xf32>
    %5 = arith.addf %2, %4 : vector<16x128xf32>
    %cst_5 = arith.constant 0.000000e+00 : f32
    %6 = vector.broadcast %cst_5 : f32 to vector<16x128xf32>
    %7 = arith.maximumf %5, %6 : vector<16x128xf32>
    %cst_6 = arith.constant dense<0.000000e+00> : vector<16xf32>
    %8 = vector.multi_reduction <add>, %7, %cst_6 [1] : vector<16x128xf32> to vector<16xf32>
    %9 = vector.shape_cast %8 : vector<16xf32> to vector<16x1xf32>
    %cst_7 = arith.constant 3.125000e-02 : f32
    %10 = vector.broadcast %cst_7 : f32 to vector<16x1xf32>
    %11 = arith.mulf %9, %10 : vector<16x1xf32>
    %12 = arith.mulf %7, %7 : vector<16x128xf32>
    %cst_8 = arith.constant dense<0.000000e+00> : vector<16xf32>
    %13 = vector.multi_reduction <add>, %12, %cst_8 [1] : vector<16x128xf32> to vector<16xf32>
    %14 = vector.shape_cast %13 : vector<16xf32> to vector<16x1xf32>
    %cst_9 = arith.constant 3.125000e-02 : f32
    %15 = vector.broadcast %cst_9 : f32 to vector<16x1xf32>
    %16 = arith.mulf %14, %15 : vector<16x1xf32>
    %17 = arith.mulf %11, %11 : vector<16x1xf32>
    %18 = arith.subf %16, %17 : vector<16x1xf32>
    %cst_10 = arith.constant 0.000000e+00 : f32
    %19 = vector.broadcast %cst_10 : f32 to vector<16x1xf32>
    %20 = arith.maximumf %18, %19 : vector<16x1xf32>
    %21 = vector.broadcast %11 : vector<16x1xf32> to vector<16x128xf32>
    %22 = arith.subf %7, %21 : vector<16x128xf32>
    %cst_11 = arith.constant 9.99999974E-6 : f32
    %23 = vector.broadcast %cst_11 : f32 to vector<16x1xf32>
    %24 = arith.addf %20, %23 : vector<16x1xf32>
    %25 = math.rsqrt %24 : vector<16x1xf32>
    %26 = vector.broadcast %25 : vector<16x1xf32> to vector<16x128xf32>
    %27 = arith.mulf %22, %26 : vector<16x128xf32>
    %c0_12 = arith.constant 0 : index
    %c0_13 = arith.constant 0 : index
    %28 = vector.load %arg5[%c0_12, %c0_13] : memref<2x128xf32, #tpu.memory_space<vmem>>, vector<1x128xf32>
    %29 = vector.broadcast %28 : vector<1x128xf32> to vector<16x128xf32>
    %30 = arith.mulf %27, %29 : vector<16x128xf32>
    %c0_14 = arith.constant 0 : index
    %c0_15 = arith.constant 0 : index
    %31 = vector.load %arg6[%c0_14, %c0_15] : memref<2x128xf32, #tpu.memory_space<vmem>>, vector<1x128xf32>
    %32 = vector.broadcast %31 : vector<1x128xf32> to vector<16x128xf32>
    %33 = arith.addf %30, %32 : vector<16x128xf32>
    %34 = arith.truncf %33 : vector<16x128xf32> to vector<16x128xbf16>
    %c0_16 = arith.constant 0 : index
    %c0_17 = arith.constant 0 : index
    %c0_18 = arith.constant 0 : index
    %35 = vector.load %arg3[%c0_16, %c0_17, %c0_18] : memref<1x128x128xbf16, #tpu.memory_space<vmem>>, vector<1x128x128xbf16>
    %36 = vector.shape_cast %35 : vector<1x128x128xbf16> to vector<128x128xbf16>
    %cst_19 = arith.constant dense<0.000000e+00> : vector<16x128xf32>
    %37 = tpu.matmul %34, %36, %cst_19 {dimension_numbers = #tpu.dot_dimension_numbers<[1], [0], [0], [1], [0, 0, 1, 1], [], []>} : vector<16x128xbf16>, vector<128x128xbf16>, vector<16x128xf32> -> vector<16x128xf32>
    %c1 = arith.constant 1 : index
    %c0_20 = arith.constant 0 : index
    %38 = vector.load %arg4[%c1, %c0_20] : memref<2x128xf32, #tpu.memory_space<vmem>>, vector<1x128xf32>
    %39 = vector.broadcast %38 : vector<1x128xf32> to vector<16x128xf32>
    %40 = arith.addf %37, %39 : vector<16x128xf32>
    %cst_21 = arith.constant 0.000000e+00 : f32
    %41 = vector.broadcast %cst_21 : f32 to vector<16x128xf32>
    %42 = arith.maximumf %40, %41 : vector<16x128xf32>
    %cst_22 = arith.constant dense<0.000000e+00> : vector<16xf32>
    %43 = vector.multi_reduction <add>, %42, %cst_22 [1] : vector<16x128xf32> to vector<16xf32>
    %44 = vector.shape_cast %43 : vector<16xf32> to vector<16x1xf32>
    %cst_23 = arith.constant 3.125000e-02 : f32
    %45 = vector.broadcast %cst_23 : f32 to vector<16x1xf32>
    %46 = arith.mulf %44, %45 : vector<16x1xf32>
    %47 = arith.mulf %42, %42 : vector<16x128xf32>
    %cst_24 = arith.constant dense<0.000000e+00> : vector<16xf32>
    %48 = vector.multi_reduction <add>, %47, %cst_24 [1] : vector<16x128xf32> to vector<16xf32>
    %49 = vector.shape_cast %48 : vector<16xf32> to vector<16x1xf32>
    %cst_25 = arith.constant 3.125000e-02 : f32
    %50 = vector.broadcast %cst_25 : f32 to vector<16x1xf32>
    %51 = arith.mulf %49, %50 : vector<16x1xf32>
    %52 = arith.mulf %46, %46 : vector<16x1xf32>
    %53 = arith.subf %51, %52 : vector<16x1xf32>
    %cst_26 = arith.constant 0.000000e+00 : f32
    %54 = vector.broadcast %cst_26 : f32 to vector<16x1xf32>
    %55 = arith.maximumf %53, %54 : vector<16x1xf32>
    %56 = vector.broadcast %46 : vector<16x1xf32> to vector<16x128xf32>
    %57 = arith.subf %42, %56 : vector<16x128xf32>
    %cst_27 = arith.constant 9.99999974E-6 : f32
    %58 = vector.broadcast %cst_27 : f32 to vector<16x1xf32>
    %59 = arith.addf %55, %58 : vector<16x1xf32>
    %60 = math.rsqrt %59 : vector<16x1xf32>
    %61 = vector.broadcast %60 : vector<16x1xf32> to vector<16x128xf32>
    %62 = arith.mulf %57, %61 : vector<16x128xf32>
    %c1_28 = arith.constant 1 : index
    %c0_29 = arith.constant 0 : index
    %63 = vector.load %arg5[%c1_28, %c0_29] : memref<2x128xf32, #tpu.memory_space<vmem>>, vector<1x128xf32>
    %64 = vector.broadcast %63 : vector<1x128xf32> to vector<16x128xf32>
    %65 = arith.mulf %62, %64 : vector<16x128xf32>
    %c1_30 = arith.constant 1 : index
    %c0_31 = arith.constant 0 : index
    %66 = vector.load %arg6[%c1_30, %c0_31] : memref<2x128xf32, #tpu.memory_space<vmem>>, vector<1x128xf32>
    %67 = vector.broadcast %66 : vector<1x128xf32> to vector<16x128xf32>
    %68 = arith.addf %65, %67 : vector<16x128xf32>
    %69 = arith.truncf %68 : vector<16x128xf32> to vector<16x128xbf16>
    %c0_32 = arith.constant 0 : index
    %c0_33 = arith.constant 0 : index
    %70 = vector.load %arg7[%c0_32, %c0_33] : memref<128x128xbf16, #tpu.memory_space<vmem>>, vector<128x128xbf16>
    %cst_34 = arith.constant dense<0.000000e+00> : vector<16x128xf32>
    %71 = tpu.matmul %69, %70, %cst_34 {dimension_numbers = #tpu.dot_dimension_numbers<[1], [0], [0], [1], [0, 0, 1, 1], [], []>} : vector<16x128xbf16>, vector<128x128xbf16>, vector<16x128xf32> -> vector<16x128xf32>
    %c0_35 = arith.constant 0 : index
    %c0_36 = arith.constant 0 : index
    %72 = vector.load %arg8[%c0_35, %c0_36] : memref<1x128xf32, #tpu.memory_space<vmem>>, vector<1x128xf32>
    %73 = vector.broadcast %72 : vector<1x128xf32> to vector<16x128xf32>
    %74 = arith.addf %71, %73 : vector<16x128xf32>
    %c0_37 = arith.constant 0 : index
    %c0_38 = arith.constant 0 : index
    %75 = vector.load %arg9[%c0_37, %c0_38] : memref<16x128xf32, #tpu.memory_space<vmem>>, vector<16x128xf32>
    tpu.vector_store %arg9[%c0_37, %c0_38], %74 {strides = array<i32>} : memref<16x128xf32, #tpu.memory_space<vmem>>, vector<16x128xf32>,
    return
  }
  func.func @transform_0(%arg0: i32) -> (i32, i32) {
    %c0_i32 = arith.constant 0 : i32
    %c0_i32_0 = arith.constant 0 : i32
    return %arg0, %c0_i32 : i32, i32
  }
  func.func @transform_1(%arg0: i32) -> (i32, i32) {
    %c0_i32 = arith.constant 0 : i32
    %c0_i32_0 = arith.constant 0 : i32
    %c0_i32_1 = arith.constant 0 : i32
    return %c0_i32, %c0_i32_0 : i32, i32
  }
  func.func @transform_2(%arg0: i32) -> (i32, i32, i32) {
    %c0_i32 = arith.constant 0 : i32
    %c0_i32_0 = arith.constant 0 : i32
    %c0_i32_1 = arith.constant 0 : i32
    %c0_i32_2 = arith.constant 0 : i32
    return %c0_i32, %c0_i32_0, %c0_i32_1 : i32, i32, i32
  }
  func.func @transform_3(%arg0: i32) -> (i32, i32) {
    %c0_i32 = arith.constant 0 : i32
    %c0_i32_0 = arith.constant 0 : i32
    %c0_i32_1 = arith.constant 0 : i32
    return %c0_i32, %c0_i32_0 : i32, i32
  }
  func.func @transform_4(%arg0: i32) -> (i32, i32) {
    %c0_i32 = arith.constant 0 : i32
    %c0_i32_0 = arith.constant 0 : i32
    %c0_i32_1 = arith.constant 0 : i32
    return %c0_i32, %c0_i32_0 : i32, i32
  }
  func.func @transform_5(%arg0: i32) -> (i32, i32) {
    %c0_i32 = arith.constant 0 : i32
    %c0_i32_0 = arith.constant 0 : i32
    %c0_i32_1 = arith.constant 0 : i32
    return %c0_i32, %c0_i32_0 : i32, i32
  }
  func.func @transform_6(%arg0: i32) -> (i32, i32) {
    %c0_i32 = arith.constant 0 : i32
    %c0_i32_0 = arith.constant 0 : i32
    %c0_i32_1 = arith.constant 0 : i32
    return %c0_i32, %c0_i32_0 : i32, i32
  }
  func.func @transform_7(%arg0: i32) -> (i32, i32) {
    %c0_i32 = arith.constant 0 : i32
    %c0_i32_0 = arith.constant 0 : i32
    %c0_i32_1 = arith.constant 0 : i32
    return %c0_i32, %c0_i32_0 : i32, i32
  }
  func.func @transform_8(%arg0: i32) -> (i32, i32) {
    %c0_i32 = arith.constant 0 : i32
    %c0_i32_0 = arith.constant 0 : i32
    return %arg0, %c0_i32 : i32, i32
  }
}

</mosaic_0001>

<llo_original>
// kernel: tpu_custom_call.1
$region0: #{tpu_custom_call.1}
  #allocation0 [shape = 'u32[]', space=smem, size = 0x4, offset = 0x4, fixed_abs, tag = 'smem constant byte address 0x4 - core index']
  #allocation1 [shape = 'u32[144,128]{1,0:T(1,128)}', space=vmem, size = 0x12000, scoped, tag = 'internal scratch']
  %s0 = inlined_call_operand.hbm [shape: bf16[16,128], index: 0, kind: input, shape index: {}]
  %s1 = inlined_call_operand.hbm [shape: bf16[128,128], index: 1, kind: input, shape index: {}]
  %s2 = inlined_call_operand.hbm [shape: bf16[1,128,128], index: 2, kind: input, shape index: {}]
  %s3 = inlined_call_operand.vmem [shape: f32[2,128], index: 3, kind: input, shape index: {}]
  %s4 = inlined_call_operand.vmem [shape: f32[2,128], index: 4, kind: input, shape index: {}]
  %s5 = inlined_call_operand.vmem [shape: f32[2,128], index: 5, kind: input, shape index: {}]
  %s6 = inlined_call_operand.hbm [shape: bf16[128,128], index: 6, kind: input, shape index: {}]
  %s7 = inlined_call_operand.vmem [shape: f32[1,128], index: 7, kind: input, shape index: {}]
  %s8 = inlined_call_operand.hbm [shape: f32[16,128], index: 8, kind: output, shape index: {}]
  %s9 = sld [smem:[#allocation0]]
  $region58: #{tpu_custom_call.1} parent=0
    _
  %s11 = ssub.s32 1, %s9
  %s12 = scalar_select 0, %s11, %s9
  $region1: #{tpu_custom_call.1} parent=0
    #allocation2 [shape = 'u8[4096]{0}', space=vmem, size = 0x1000, scoped, tag = 'input window, operand 0, single buffered']
    #allocation3 [shape = 's32[1]{0}', space=sflag, size = 0x4, scoped, tag = 'scoped memory for tpu_custom_call.1']
    #allocation4 [shape = 's32[1]{0}', space=sflag, size = 0x4, scoped, tag = 'scoped memory for tpu_custom_call.1']
    #allocation5 [shape = 'u8[32768]{0}', space=vmem, size = 0x8000, scoped, tag = 'input window, operand 1, single buffered']
    #allocation6 [shape = 's32[1]{0}', space=sflag, size = 0x4, scoped, tag = 'scoped memory for tpu_custom_call.1']
    #allocation7 [shape = 'u8[32768]{0}', space=vmem, size = 0x8000, scoped, tag = 'input window, operand 2, single buffered']
    #allocation8 [shape = 'u8[32768]{0}', space=vmem, size = 0x8000, scoped, tag = 'input window, operand 6, single buffered']
    #allocation9 [shape = 's32[1]{0}', space=sflag, size = 0x4, scoped, tag = 'scoped memory for tpu_custom_call.1']
    #allocation10 [shape = 'u8[8192]{0}', space=vmem, size = 0x2000, scoped, tag = 'output window, operand 0, single buffered']
    %13 = vsyncpa [#allocation3], 0
    %14 = vsyncpa [#allocation6], 0
    %15 = vsyncpa [#allocation9], 0
    %16 = vsyncpa [#allocation4], 0
    // Predicated region
    $region2: #{tpu_custom_call.1} parent=1 // pred_check
      _
    $region3: #{tpu_custom_call.1} parent=1 // pred_check_branch
      %18 = sbr.rel (0) target = $region5
    $region4: #{tpu_custom_call.1} parent=1 // pred_region
      %s20 = ssub.s32 128, 128
      %21 = vsyncadd [#allocation3], %s20
      %s22 = sshll.u32 [#allocation2], 4
      %s23 = int_to_ptr.vmem [resolvable:$true] %s22
      %28 = dma.hbm_to_vmem [thread:$0]  %s0, 128, %s23, [#allocation3], 64, 64, 4
    $region5: #{tpu_custom_call.1} parent=1 // pred_fallthru
      _
    // Predicated region
    $region6: #{tpu_custom_call.1} parent=1 // pred_check
      _
    $region7: #{tpu_custom_call.1} parent=1 // pred_check_branch
      %30 = sbr.rel (0) target = $region9
    $region8: #{tpu_custom_call.1} parent=1 // pred_region
      %s32 = ssub.s32 1024, 1024
      %33 = vsyncadd [#allocation6], %s32
      %s34 = sshll.u32 [#allocation5], 4
      %s35 = int_to_ptr.vmem [resolvable:$true] %s34
      %40 = dma.hbm_to_vmem [thread:$0]  %s1, 1024, %s35, [#allocation6], 64, 64, 4
    $region9: #{tpu_custom_call.1} parent=1 // pred_fallthru
      _
    // Predicated region
    $region10: #{tpu_custom_call.1} parent=1 // pred_check
      _
    $region11: #{tpu_custom_call.1} parent=1 // pred_check_branch
      %42 = sbr.rel (0) target = $region13
    $region12: #{tpu_custom_call.1} parent=1 // pred_region
      %s44 = ssub.s32 1024, 1024
      %45 = vsyncadd [#allocation6], %s44
      %s46 = sshll.u32 [#allocation7], 4
      %s47 = int_to_ptr.vmem [resolvable:$true] %s46
      %52 = dma.hbm_to_vmem [thread:$0]  %s2, 1024, %s47, [#allocation6], 64, 64, 4
    $region13: #{tpu_custom_call.1} parent=1 // pred_fallthru
      _
    // Predicated region
    $region14: #{tpu_custom_call.1} parent=1 // pred_check
      _
    $region15: #{tpu_custom_call.1} parent=1 // pred_check_branch
      %54 = sbr.rel (0) target = $region17
    $region16: #{tpu_custom_call.1} parent=1 // pred_region
      _
    $region17: #{tpu_custom_call.1} parent=1 // pred_fallthru
      _
    // Predicated region
    $region18: #{tpu_custom_call.1} parent=1 // pred_check
      _
    $region19: #{tpu_custom_call.1} parent=1 // pred_check_branch
      %56 = sbr.rel (0) target = $region21
    $region20: #{tpu_custom_call.1} parent=1 // pred_region
      _
    $region21: #{tpu_custom_call.1} parent=1 // pred_fallthru
      _
    // Predicated region
    $region22: #{tpu_custom_call.1} parent=1 // pred_check
      _
    $region23: #{tpu_custom_call.1} parent=1 // pred_check_branch
      %58 = sbr.rel (0) target = $region25
    $region24: #{tpu_custom_call.1} parent=1 // pred_region
      _
    $region25: #{tpu_custom_call.1} parent=1 // pred_fallthru
      _
    // Predicated region
    $region26: #{tpu_custom_call.1} parent=1 // pred_check
      _
    $region27: #{tpu_custom_call.1} parent=1 // pred_check_branch
      %60 = sbr.rel (0) target = $region29
    $region28: #{tpu_custom_call.1} parent=1 // pred_region
      %s62 = ssub.s32 1024, 1024
      %63 = vsyncadd [#allocation9], %s62
      %s64 = sshll.u32 [#allocation8], 4
      %s65 = int_to_ptr.vmem [resolvable:$true] %s64
      %70 = dma.hbm_to_vmem [thread:$0]  %s6, 1024, %s65, [#allocation9], 64, 64, 4
    $region29: #{tpu_custom_call.1} parent=1 // pred_fallthru
      _
    // Predicated region
    $region30: #{tpu_custom_call.1} parent=1 // pred_check
      _
    $region31: #{tpu_custom_call.1} parent=1 // pred_check_branch
      %72 = sbr.rel (0) target = $region33
    $region32: #{tpu_custom_call.1} parent=1 // pred_region
      _
    $region33: #{tpu_custom_call.1} parent=1 // pred_fallthru
      _
    // Predicated region
    $region34: #{tpu_custom_call.1} parent=1 // pred_check
      _
    $region35: #{tpu_custom_call.1} parent=1 // pred_check_branch
      %74 = sbr.rel (0) target = $region37
    $region36: #{tpu_custom_call.1} parent=1 // pred_region
      %75 = dma.done [#allocation3], 128
    $region37: #{tpu_custom_call.1} parent=1 // pred_fallthru
      _
    // Predicated region
    $region38: #{tpu_custom_call.1} parent=1 // pred_check
      _
    $region39: #{tpu_custom_call.1} parent=1 // pred_check_branch
      %77 = sbr.rel (0) target = $region41
    $region40: #{tpu_custom_call.1} parent=1 // pred_region
      %78 = dma.done [#allocation6], 1024
    $region41: #{tpu_custom_call.1} parent=1 // pred_fallthru
      _
    // Predicated region
    $region42: #{tpu_custom_call.1} parent=1 // pred_check
      _
    $region43: #{tpu_custom_call.1} parent=1 // pred_check_branch
      %80 = sbr.rel (0) target = $region45
    $region44: #{tpu_custom_call.1} parent=1 // pred_region
      %81 = dma.done [#allocation6], 1024
    $region45: #{tpu_custom_call.1} parent=1 // pred_fallthru
      _
    // Predicated region
    $region46: #{tpu_custom_call.1} parent=1 // pred_check
      _
    $region47: #{tpu_custom_call.1} parent=1 // pred_check_branch
      %83 = sbr.rel (0) target = $region49
    $region48: #{tpu_custom_call.1} parent=1 // pred_region
      %84 = dma.done [#allocation9], 1024
    $region49: #{tpu_custom_call.1} parent=1 // pred_fallthru
      _
    %v86 = vld [vmem:[#allocation2] sm:$0xf]
    %v87 = vld [vmem:[#allocation2 + $0x4] sm:$0xf]
    %v88 = vld [vmem:[#allocation5] sm:$0xf]
    %v89 = vld [vmem:[#allocation5 + $0x4] sm:$0xf]
    %v90 = vld [vmem:[#allocation5 + $0x8] sm:$0xf]
    %v91 = vld [vmem:[#allocation5 + $0xc] sm:$0xf]
    %v92 = vld [vmem:[#allocation5 + $0x10] sm:$0xf]
    %v93 = vld [vmem:[#allocation5 + $0x14] sm:$0xf]
    %v94 = vld [vmem:[#allocation5 + $0x18] sm:$0xf]
    %v95 = vld [vmem:[#allocation5 + $0x1c] sm:$0xf]
    %v96 = vld [vmem:[#allocation5 + $0x20] sm:$0xf]
    %v97 = vld [vmem:[#allocation5 + $0x24] sm:$0xf]
    %v98 = vld [vmem:[#allocation5 + $0x28] sm:$0xf]
    %v99 = vld [vmem:[#allocation5 + $0x2c] sm:$0xf]
    %v100 = vld [vmem:[#allocation5 + $0x30] sm:$0xf]
    %v101 = vld [vmem:[#allocation5 + $0x34] sm:$0xf]
    %v102 = vld [vmem:[#allocation5 + $0x38] sm:$0xf]
    %v103 = vld [vmem:[#allocation5 + $0x3c] sm:$0xf]
    %v104 = vld [vmem:[%s3] sm:$0x1]
    %v105 = vlaneseq
    %v106 = vshrl.u32 %v105, 7
    %v107 = vsub.s32 0, %v106
    %v108 = vrot.slane %v104, %v107
    %v111 = vunpack.c.l.b16 %v86
    %v112 = vunpack.c.l.b16 %v87
    %v113 = vpack.c.b16 %v112, %v111
    %v131 = vunpack.c.l.b16 %v88
    %v132 = vunpack.c.l.b16 %v89
    %v133 = vunpack.c.l.b16 %v90
    %v134 = vunpack.c.l.b16 %v91
    %v135 = vunpack.c.l.b16 %v92
    %v136 = vunpack.c.l.b16 %v93
    %v137 = vunpack.c.l.b16 %v94
    %v138 = vunpack.c.l.b16 %v95
    %v139 = vunpack.c.l.b16 %v96
    %v140 = vunpack.c.l.b16 %v97
    %v141 = vunpack.c.l.b16 %v98
    %v142 = vunpack.c.l.b16 %v99
    %v143 = vunpack.c.l.b16 %v100
    %v144 = vunpack.c.l.b16 %v101
    %v145 = vunpack.c.l.b16 %v102
    %v146 = vunpack.c.l.b16 %v103
    %v147 = vpack.c.b16 %v132, %v131
    %v148 = vpack.c.b16 %v134, %v133
    %v149 = vpack.c.b16 %v136, %v135
    %v150 = vpack.c.b16 %v138, %v137
    %v151 = vpack.c.b16 %v140, %v139
    %v152 = vpack.c.b16 %v142, %v141
    %v153 = vpack.c.b16 %v144, %v143
    %v154 = vpack.c.b16 %v146, %v145
    %163 = vmatprep.subr.bf16.mxu0 0
    %164 = vmatpush1.bf16.msra.mxu0 %v147
    %165 = vmatprep.subr.bf16.mxu0 0
    %166 = vmatpush1.bf16.msra.mxu0 %v148
    %167 = vmatprep.subr.bf16.mxu0 0
    %168 = vmatpush1.bf16.msra.mxu0 %v149
    %169 = vmatprep.subr.bf16.mxu0 0
    %170 = vmatpush1.bf16.msra.mxu0 %v150
    %171 = vmatprep.subr.bf16.mxu0 0
    %172 = vmatpush1.bf16.msra.mxu0 %v151
    %173 = vmatprep.subr.bf16.mxu0 0
    %174 = vmatpush1.bf16.msra.mxu0 %v152
    %175 = vmatprep.subr.bf16.mxu0 0
    %176 = vmatpush1.bf16.msra.mxu0 %v153
    %177 = vmatprep.subr.bf16.mxu0 0
    %178 = vmatpush1.bf16.msra.mxu0 %v154
    %179 = vmatprep.subr.bf16.mxu0 0
    %180 = vmatpush1.bf16.msra.mxu0 0
    %181 = vmatprep.subr.bf16.mxu0 0
    %182 = vmatpush1.bf16.msra.mxu0 0
    %183 = vmatprep.subr.bf16.mxu0 0
    %184 = vmatpush1.bf16.msra.mxu0 0
    %185 = vmatprep.subr.bf16.mxu0 0
    %186 = vmatpush1.bf16.msra.mxu0 0
    %187 = vmatprep.subr.bf16.mxu0 0
    %188 = vmatpush1.bf16.msra.mxu0 0
    %189 = vmatprep.subr.bf16.mxu0 0
    %190 = vmatpush1.bf16.msra.mxu0 0
    %191 = vmatprep.subr.bf16.mxu0 0
    %192 = vmatpush1.bf16.msra.mxu0 0
    %193 = vmatprep.subr.bf16.mxu0 0
    %194 = vmatpush1.bf16.msra.mxu0 0
    %195 = vmatprep.mubr.bf16.mxu0 0
    %196 = vmatmul.mubr.bf16.gmra.mrb[0].mxu0 %v113
    %v197 = vpop.f32.mrb[0].mxu0
    %v198 = vadd.f32 %v108, %v197
    %v199 = vpop.f32.mrb[0].mxu0
    %v200 = vpop.f32.mrb[0].mxu0
    %v201 = vadd.f32 %v108, %v200
    %v202 = vpop.f32.mrb[0].mxu0
    %203 = vdwg.mxu0
    %v204 = vmax.f32 %v198, 0.0
    %v205 = vmax.f32 %v201, 0.0
    %206 = vadd.xlane.f32.xlu0 %v204
    %v207 = vpop.xlane.xlu0 %206
    %208 = vadd.xlane.f32.xlu0 %v205
    %v209 = vpop.xlane.xlu0 %208
    %v210 = vmul.f32 %v207, 0.03125
    %v211 = vmul.f32 %v209, 0.03125
    %v212 = vmul.f32 %v204, %v204
    %v213 = vmul.f32 %v205, %v205
    %214 = vadd.xlane.f32.xlu0 %v212
    %v215 = vpop.xlane.xlu0 %214
    %216 = vadd.xlane.f32.xlu0 %v213
    %v217 = vpop.xlane.xlu0 %216
    %v218 = vmul.f32 %v215, 0.03125
    %v219 = vmul.f32 %v217, 0.03125
    %v220 = vmul.f32 %v210, %v210
    %v221 = vmul.f32 %v211, %v211
    %v222 = vsub.f32 %v218, %v220
    %v223 = vsub.f32 %v219, %v221
    %v224 = vmax.f32 %v222, 0.0
    %v225 = vmax.f32 %v223, 0.0
    %v226 = vsub.f32 %v204, %v210
    %v227 = vsub.f32 %v205, %v211
    %v228 = vadd.f32 %v224, 1e-05
    %v229 = vadd.f32 %v225, 1e-05
    %v230 = vrsqrt.pop %v228
    %v231 = vrsqrt.pop %v229
    %v232 = vmul.f32 %v226, %v230
    %v233 = vmul.f32 %v227, %v231
    %v234 = vld [vmem:[%s4] sm:$0x1]
    %v235 = vlaneseq
    %v236 = vshrl.u32 %v235, 7
    %v237 = vsub.s32 0, %v236
    %v238 = vrot.slane %v234, %v237
    %v239 = vmul.f32 %v232, %v238
    %v240 = vmul.f32 %v233, %v238
    %v241 = vld [vmem:[%s5] sm:$0x1]
    %v242 = vlaneseq
    %v243 = vshrl.u32 %v242, 7
    %v244 = vsub.s32 0, %v243
    %v245 = vrot.slane %v241, %v244
    %v246 = vadd.f32 %v239, %v245
    %v247 = vadd.f32 %v240, %v245
    %v248 = vpack.c.bf16 %v247, %v246
    %v249 = vld [vmem:[#allocation7] sm:$0xf]
    %v250 = vld [vmem:[#allocation7 + $0x4] sm:$0xf]
    %v251 = vld [vmem:[#allocation7 + $0x8] sm:$0xf]
    %v252 = vld [vmem:[#allocation7 + $0xc] sm:$0xf]
    %v253 = vld [vmem:[#allocation7 + $0x10] sm:$0xf]
    %v254 = vld [vmem:[#allocation7 + $0x14] sm:$0xf]
    %v255 = vld [vmem:[#allocation7 + $0x18] sm:$0xf]
    %v256 = vld [vmem:[#allocation7 + $0x1c] sm:$0xf]
    %v257 = vld [vmem:[#allocation7 + $0x20] sm:$0xf]
    %v258 = vld [vmem:[#allocation7 + $0x24] sm:$0xf]
    %v259 = vld [vmem:[#allocation7 + $0x28] sm:$0xf]
    %v260 = vld [vmem:[#allocation7 + $0x2c] sm:$0xf]
    %v261 = vld [vmem:[#allocation7 + $0x30] sm:$0xf]
    %v262 = vld [vmem:[#allocation7 + $0x34] sm:$0xf]
    %v263 = vld [vmem:[#allocation7 + $0x38] sm:$0xf]
    %v264 = vld [vmem:[#allocation7 + $0x3c] sm:$0xf]
    %v265 = vld [vmem:[%s3 + $0x1] sm:$0x1]
    %v266 = vlaneseq
    %v267 = vshrl.u32 %v266, 7
    %v268 = vsub.s32 0, %v267
    %v269 = vrot.slane %v265, %v268
    %v286 = vunpack.c.l.b16 %v249
    %v287 = vunpack.c.l.b16 %v250
    %v288 = vunpack.c.l.b16 %v251
    %v289 = vunpack.c.l.b16 %v252
    %v290 = vunpack.c.l.b16 %v253
    %v291 = vunpack.c.l.b16 %v254
    %v292 = vunpack.c.l.b16 %v255
    %v293 = vunpack.c.l.b16 %v256
    %v294 = vunpack.c.l.b16 %v257
    %v295 = vunpack.c.l.b16 %v258
    %v296 = vunpack.c.l.b16 %v259
    %v297 = vunpack.c.l.b16 %v260
    %v298 = vunpack.c.l.b16 %v261
    %v299 = vunpack.c.l.b16 %v262
    %v300 = vunpack.c.l.b16 %v263
    %v301 = vunpack.c.l.b16 %v264
    %v302 = vpack.c.b16 %v287, %v286
    %v303 = vpack.c.b16 %v289, %v288
    %v304 = vpack.c.b16 %v291, %v290
    %v305 = vpack.c.b16 %v293, %v292
    %v306 = vpack.c.b16 %v295, %v294
    %v307 = vpack.c.b16 %v297, %v296
    %v308 = vpack.c.b16 %v299, %v298
    %v309 = vpack.c.b16 %v301, %v300
    %318 = vmatprep.subr.bf16.mxu0 0
    %319 = vmatpush1.bf16.msra.mxu0 %v302
    %320 = vmatprep.subr.bf16.mxu0 0
    %321 = vmatpush1.bf16.msra.mxu0 %v303
    %322 = vmatprep.subr.bf16.mxu0 0
    %323 = vmatpush1.bf16.msra.mxu0 %v304
    %324 = vmatprep.subr.bf16.mxu0 0
    %325 = vmatpush1.bf16.msra.mxu0 %v305
    %326 = vmatprep.subr.bf16.mxu0 0
    %327 = vmatpush1.bf16.msra.mxu0 %v306
    %328 = vmatprep.subr.bf16.mxu0 0
    %329 = vmatpush1.bf16.msra.mxu0 %v307
    %330 = vmatprep.subr.bf16.mxu0 0
    %331 = vmatpush1.bf16.msra.mxu0 %v308
    %332 = vmatprep.subr.bf16.mxu0 0
    %333 = vmatpush1.bf16.msra.mxu0 %v309
    %334 = vmatprep.subr.bf16.mxu0 0
    %335 = vmatpush1.bf16.msra.mxu0 0
    %336 = vmatprep.subr.bf16.mxu0 0
    %337 = vmatpush1.bf16.msra.mxu0 0
    %338 = vmatprep.subr.bf16.mxu0 0
    %339 = vmatpush1.bf16.msra.mxu0 0
    %340 = vmatprep.subr.bf16.mxu0 0
    %341 = vmatpush1.bf16.msra.mxu0 0
    %342 = vmatprep.subr.bf16.mxu0 0
    %343 = vmatpush1.bf16.msra.mxu0 0
    %344 = vmatprep.subr.bf16.mxu0 0
    %345 = vmatpush1.bf16.msra.mxu0 0
    %346 = vmatprep.subr.bf16.mxu0 0
    %347 = vmatpush1.bf16.msra.mxu0 0
    %348 = vmatprep.subr.bf16.mxu0 0
    %349 = vmatpush1.bf16.msra.mxu0 0
    %350 = vmatprep.mubr.bf16.mxu0 0
    %351 = vmatmul.mubr.bf16.gmra.mrb[0].mxu0 %v248
    %v352 = vpop.f32.mrb[0].mxu0
    %v353 = vadd.f32 %v269, %v352
    %v354 = vpop.f32.mrb[0].mxu0
    %v355 = vpop.f32.mrb[0].mxu0
    %v356 = vadd.f32 %v269, %v355
    %v357 = vpop.f32.mrb[0].mxu0
    %358 = vdwg.mxu0
    %v359 = vmax.f32 %v353, 0.0
    %v360 = vmax.f32 %v356, 0.0
    %361 = vadd.xlane.f32.xlu0 %v359
    %v362 = vpop.xlane.xlu0 %361
    %363 = vadd.xlane.f32.xlu0 %v360
    %v364 = vpop.xlane.xlu0 %363
    %v365 = vmul.f32 %v362, 0.03125
    %v366 = vmul.f32 %v364, 0.03125
    %v367 = vmul.f32 %v359, %v359
    %v368 = vmul.f32 %v360, %v360
    %369 = vadd.xlane.f32.xlu0 %v367
    %v370 = vpop.xlane.xlu0 %369
    %371 = vadd.xlane.f32.xlu0 %v368
    %v372 = vpop.xlane.xlu0 %371
    %v373 = vmul.f32 %v370, 0.03125
    %v374 = vmul.f32 %v372, 0.03125
    %v375 = vmul.f32 %v365, %v365
    %v376 = vmul.f32 %v366, %v366
    %v377 = vsub.f32 %v373, %v375
    %v378 = vsub.f32 %v374, %v376
    %v379 = vmax.f32 %v377, 0.0
    %v380 = vmax.f32 %v378, 0.0
    %v381 = vsub.f32 %v359, %v365
    %v382 = vsub.f32 %v360, %v366
    %v383 = vadd.f32 %v379, 1e-05
    %v384 = vadd.f32 %v380, 1e-05
    %v385 = vrsqrt.pop %v383
    %v386 = vrsqrt.pop %v384
    %v387 = vmul.f32 %v381, %v385
    %v388 = vmul.f32 %v382, %v386
    %v389 = vld [vmem:[%s4 + $0x1] sm:$0x1]
    %v390 = vlaneseq
    %v391 = vshrl.u32 %v390, 7
    %v392 = vsub.s32 0, %v391
    %v393 = vrot.slane %v389, %v392
    %v394 = vmul.f32 %v387, %v393
    %v395 = vmul.f32 %v388, %v393
    %v396 = vld [vmem:[%s5 + $0x1] sm:$0x1]
    %v397 = vlaneseq
    %v398 = vshrl.u32 %v397, 7
    %v399 = vsub.s32 0, %v398
    %v400 = vrot.slane %v396, %v399
    %v401 = vadd.f32 %v394, %v400
    %v402 = vadd.f32 %v395, %v400
    %v403 = vpack.c.bf16 %v402, %v401
    %v404 = vld [vmem:[#allocation8] sm:$0xf]
    %v405 = vld [vmem:[#allocation8 + $0x4] sm:$0xf]
    %v406 = vld [vmem:[#allocation8 + $0x8] sm:$0xf]
    %v407 = vld [vmem:[#allocation8 + $0xc] sm:$0xf]
    %v408 = vld [vmem:[#allocation8 + $0x10] sm:$0xf]
    %v409 = vld [vmem:[#allocation8 + $0x14] sm:$0xf]
    %v410 = vld [vmem:[#allocation8 + $0x18] sm:$0xf]
    %v411 = vld [vmem:[#allocation8 + $0x1c] sm:$0xf]
    %v412 = vld [vmem:[#allocation8 + $0x20] sm:$0xf]
    %v413 = vld [vmem:[#allocation8 + $0x24] sm:$0xf]
    %v414 = vld [vmem:[#allocation8 + $0x28] sm:$0xf]
    %v415 = vld [vmem:[#allocation8 + $0x2c] sm:$0xf]
    %v416 = vld [vmem:[#allocation8 + $0x30] sm:$0xf]
    %v417 = vld [vmem:[#allocation8 + $0x34] sm:$0xf]
    %v418 = vld [vmem:[#allocation8 + $0x38] sm:$0xf]
    %v419 = vld [vmem:[#allocation8 + $0x3c] sm:$0xf]
    %v420 = vld [vmem:[%s7] sm:$0x1]
    %v422 = vlaneseq
    %v423 = vshrl.u32 %v422, 7
    %v424 = vsub.s32 0, %v423
    %v425 = vrot.slane %v420, %v424
    %v443 = vunpack.c.l.b16 %v404
    %v444 = vunpack.c.l.b16 %v405
    %v445 = vunpack.c.l.b16 %v406
    %v446 = vunpack.c.l.b16 %v407
    %v447 = vunpack.c.l.b16 %v408
    %v448 = vunpack.c.l.b16 %v409
    %v449 = vunpack.c.l.b16 %v410
    %v450 = vunpack.c.l.b16 %v411
    %v451 = vunpack.c.l.b16 %v412
    %v452 = vunpack.c.l.b16 %v413
    %v453 = vunpack.c.l.b16 %v414
    %v454 = vunpack.c.l.b16 %v415
    %v455 = vunpack.c.l.b16 %v416
    %v456 = vunpack.c.l.b16 %v417
    %v457 = vunpack.c.l.b16 %v418
    %v458 = vunpack.c.l.b16 %v419
    %v459 = vpack.c.b16 %v444, %v443
    %v460 = vpack.c.b16 %v446, %v445
    %v461 = vpack.c.b16 %v448, %v447
    %v462 = vpack.c.b16 %v450, %v449
    %v463 = vpack.c.b16 %v452, %v451
    %v464 = vpack.c.b16 %v454, %v453
    %v465 = vpack.c.b16 %v456, %v455
    %v466 = vpack.c.b16 %v458, %v457
    %475 = vmatprep.subr.bf16.mxu0 0
    %476 = vmatpush1.bf16.msra.mxu0 %v459
    %477 = vmatprep.subr.bf16.mxu0 0
    %478 = vmatpush1.bf16.msra.mxu0 %v460
    %479 = vmatprep.subr.bf16.mxu0 0
    %480 = vmatpush1.bf16.msra.mxu0 %v461
    %481 = vmatprep.subr.bf16.mxu0 0
    %482 = vmatpush1.bf16.msra.mxu0 %v462
    %483 = vmatprep.subr.bf16.mxu0 0
    %484 = vmatpush1.bf16.msra.mxu0 %v463
    %485 = vmatprep.subr.bf16.mxu0 0
    %486 = vmatpush1.bf16.msra.mxu0 %v464
    %487 = vmatprep.subr.bf16.mxu0 0
    %488 = vmatpush1.bf16.msra.mxu0 %v465
    %489 = vmatprep.subr.bf16.mxu0 0
    %490 = vmatpush1.bf16.msra.mxu0 %v466
    %491 = vmatprep.subr.bf16.mxu0 0
    %492 = vmatpush1.bf16.msra.mxu0 0
    %493 = vmatprep.subr.bf16.mxu0 0
    %494 = vmatpush1.bf16.msra.mxu0 0
    %495 = vmatprep.subr.bf16.mxu0 0
    %496 = vmatpush1.bf16.msra.mxu0 0
    %497 = vmatprep.subr.bf16.mxu0 0
    %498 = vmatpush1.bf16.msra.mxu0 0
    %499 = vmatprep.subr.bf16.mxu0 0
    %500 = vmatpush1.bf16.msra.mxu0 0
    %501 = vmatprep.subr.bf16.mxu0 0
    %502 = vmatpush1.bf16.msra.mxu0 0
    %503 = vmatprep.subr.bf16.mxu0 0
    %504 = vmatpush1.bf16.msra.mxu0 0
    %505 = vmatprep.subr.bf16.mxu0 0
    %506 = vmatpush1.bf16.msra.mxu0 0
    %507 = vmatprep.mubr.bf16.mxu0 0
    %508 = vmatmul.mubr.bf16.gmra.mrb[0].mxu0 %v403
    %v509 = vpop.f32.mrb[0].mxu0
    %v510 = vadd.f32 %v425, %v509
    %v511 = vpop.f32.mrb[0].mxu0
    %v512 = vpop.f32.mrb[0].mxu0
    %v513 = vadd.f32 %v425, %v512
    %v514 = vpop.f32.mrb[0].mxu0
    %515 = vdwg.mxu0
    %516 = vst [vmem:[#allocation10] sm:$0xff] %v510
    %517 = vst [vmem:[#allocation10 + $0x8] sm:$0xff] %v513
    // Predicated region
    $region50: #{tpu_custom_call.1} parent=1 // pred_check
      _
    $region51: #{tpu_custom_call.1} parent=1 // pred_check_branch
      %519 = sbr.rel (0) target = $region53
    $region52: #{tpu_custom_call.1} parent=1 // pred_region
      %s521 = ssub.s32 256, 256
      %522 = vsyncadd [#allocation4], %s521
      %s523 = sshll.u32 [#allocation10], 4
      %s524 = int_to_ptr.vmem [resolvable:$true] %s523
      %529 = dma.vmem_to_hbm [thread:$0]  %s524, 256, %s8, [#allocation4], 128, 128, 8
    $region53: #{tpu_custom_call.1} parent=1 // pred_fallthru
      _
    // Predicated region
    $region54: #{tpu_custom_call.1} parent=1 // pred_check
      _
    $region55: #{tpu_custom_call.1} parent=1 // pred_check_branch
      %531 = sbr.rel (0) target = $region57
    $region56: #{tpu_custom_call.1} parent=1 // pred_region
      %532 = dma.done [#allocation4], 256
    $region57: #{tpu_custom_call.1} parent=1 // pred_fallthru
      _
    %533 = vsyncpa [#allocation3], 1
    %534 = vsyncpa [#allocation6], 1
    %535 = vsyncpa [#allocation9], 1
    %536 = vsyncpa [#allocation4], 1

// kernel: tpu_custom_call.1
$region0: #{tpu_custom_call.1}
  #allocation0 [shape = 'u32[]', space=smem, size = 0x4, offset = 0x4, fixed_abs, tag = 'smem constant byte address 0x4 - core index']
  #allocation1 [shape = 'u32[144,128]{1,0:T(1,128)}', space=vmem, size = 0x12000, scoped, tag = 'internal scratch']
  %s0 = inlined_call_operand.hbm [shape: bf16[16,128], index: 0, kind: input, shape index: {}]
  %s1 = inlined_call_operand.hbm [shape: bf16[128,128], index: 1, kind: input, shape index: {}]
  %s2 = inlined_call_operand.hbm [shape: bf16[1,128,128], index: 2, kind: input, shape index: {}]
  %s3 = inlined_call_operand.vmem [shape: f32[2,128], index: 3, kind: input, shape index: {}]
  %s4 = inlined_call_operand.vmem [shape: f32[2,128], index: 4, kind: input, shape index: {}]
  %s5 = inlined_call_operand.vmem [shape: f32[2,128], index: 5, kind: input, shape index: {}]
  %s6 = inlined_call_operand.hbm [shape: bf16[128,128], index: 6, kind: input, shape index: {}]
  %s7 = inlined_call_operand.vmem [shape: f32[1,128], index: 7, kind: input, shape index: {}]
  %s8 = inlined_call_operand.hbm [shape: f32[16,128], index: 8, kind: output, shape index: {}]
  %s9 = sld [smem:[#allocation0]]
  $region58: #{tpu_custom_call.1} parent=0
    _
  %s11 = ssub.s32 1, %s9
  %s12 = scalar_select 0, %s11, %s9
  $region1: #{tpu_custom_call.1} parent=0
    #allocation2 [shape = 'u8[4096]{0}', space=vmem, size = 0x1000, scoped, tag = 'input window, operand 0, single buffered']
    #allocation3 [shape = 's32[1]{0}', space=sflag, size = 0x4, scoped, tag = 'scoped memory for tpu_custom_call.1']
    #allocation4 [shape = 's32[1]{0}', space=sflag, size = 0x4, scoped, tag = 'scoped memory for tpu_custom_call.1']
    #allocation5 [shape = 'u8[32768]{0}', space=vmem, size = 0x8000, scoped, tag = 'input window, operand 1, single buffered']
    #allocation6 [shape = 's32[1]{0}', space=sflag, size = 0x4, scoped, tag = 'scoped memory for tpu_custom_call.1']
    #allocation7 [shape = 'u8[32768]{0}', space=vmem, size = 0x8000, scoped, tag = 'input window, operand 2, single buffered']
    #allocation8 [shape = 'u8[32768]{0}', space=vmem, size = 0x8000, scoped, tag = 'input window, operand 6, single buffered']
    #allocation9 [shape = 's32[1]{0}', space=sflag, size = 0x4, scoped, tag = 'scoped memory for tpu_custom_call.1']
    #allocation10 [shape = 'u8[8192]{0}', space=vmem, size = 0x2000, scoped, tag = 'output window, operand 0, single buffered']
    %13 = vsyncpa [#allocation3], 0
    %14 = vsyncpa [#allocation6], 0
    %15 = vsyncpa [#allocation9], 0
    %16 = vsyncpa [#allocation4], 0
    // Predicated region
    $region2: #{tpu_custom_call.1} parent=1 // pred_check
      _
    $region3: #{tpu_custom_call.1} parent=1 // pred_check_branch
      %18 = sbr.rel (0) target = $region5
    $region4: #{tpu_custom_call.1} parent=1 // pred_region
      %s20 = ssub.s32 128, 128
      %21 = vsyncadd [#allocation3], %s20
      %s22 = sshll.u32 [#allocation2], 4
      %s23 = int_to_ptr.vmem [resolvable:$true] %s22
      %28 = dma.hbm_to_vmem [thread:$0]  %s0, 128, %s23, [#allocation3], 64, 64, 4
    $region5: #{tpu_custom_call.1} parent=1 // pred_fallthru
      _
    // Predicated region
    $region6: #{tpu_custom_call.1} parent=1 // pred_check
      _
    $region7: #{tpu_custom_call.1} parent=1 // pred_check_branch
      %30 = sbr.rel (0) target = $region9
    $region8: #{tpu_custom_call.1} parent=1 // pred_region
      %s32 = ssub.s32 1024, 1024
      %33 = vsyncadd [#allocation6], %s32
      %s34 = sshll.u32 [#allocation5], 4
      %s35 = int_to_ptr.vmem [resolvable:$true] %s34
      %40 = dma.hbm_to_vmem [thread:$0]  %s1, 1024, %s35, [#allocation6], 64, 64, 4
    $region9: #{tpu_custom_call.1} parent=1 // pred_fallthru
      _
    // Predicated region
    $region10: #{tpu_custom_call.1} parent=1 // pred_check
      _
    $region11: #{tpu_custom_call.1} parent=1 // pred_check_branch
      %42 = sbr.rel (0) target = $region13
    $region12: #{tpu_custom_call.1} parent=1 // pred_region
      %s44 = ssub.s32 1024, 1024
      %45 = vsyncadd [#allocation6], %s44
      %s46 = sshll.u32 [#allocation7], 4
      %s47 = int_to_ptr.vmem [resolvable:$true] %s46
      %52 = dma.hbm_to_vmem [thread:$0]  %s2, 1024, %s47, [#allocation6], 64, 64, 4
    $region13: #{tpu_custom_call.1} parent=1 // pred_fallthru
      _
    // Predicated region
    $region14: #{tpu_custom_call.1} parent=1 // pred_check
      _
    $region15: #{tpu_custom_call.1} parent=1 // pred_check_branch
      %54 = sbr.rel (0) target = $region17
    $region16: #{tpu_custom_call.1} parent=1 // pred_region
      _
    $region17: #{tpu_custom_call.1} parent=1 // pred_fallthru
      _
    // Predicated region
    $region18: #{tpu_custom_call.1} parent=1 // pred_check
      _
    $region19: #{tpu_custom_call.1} parent=1 // pred_check_branch
      %56 = sbr.rel (0) target = $region21
    $region20: #{tpu_custom_call.1} parent=1 // pred_region
      _
    $region21: #{tpu_custom_call.1} parent=1 // pred_fallthru
      _
    // Predicated region
    $region22: #{tpu_custom_call.1} parent=1 // pred_check
      _
    $region23: #{tpu_custom_call.1} parent=1 // pred_check_branch
      %58 = sbr.rel (0) target = $region25
    $region24: #{tpu_custom_call.1} parent=1 // pred_region
      _
    $region25: #{tpu_custom_call.1} parent=1 // pred_fallthru
      _
    // Predicated region
    $region26: #{tpu_custom_call.1} parent=1 // pred_check
      _
    $region27: #{tpu_custom_call.1} parent=1 // pred_check_branch
      %60 = sbr.rel (0) target = $region29
    $region28: #{tpu_custom_call.1} parent=1 // pred_region
      %s62 = ssub.s32 1024, 1024
      %63 = vsyncadd [#allocation9], %s62
      %s64 = sshll.u32 [#allocation8], 4
      %s65 = int_to_ptr.vmem [resolvable:$true] %s64
      %70 = dma.hbm_to_vmem [thread:$0]  %s6, 1024, %s65, [#allocation9], 64, 64, 4
    $region29: #{tpu_custom_call.1} parent=1 // pred_fallthru
      _
    // Predicated region
    $region30: #{tpu_custom_call.1} parent=1 // pred_check
      _
    $region31: #{tpu_custom_call.1} parent=1 // pred_check_branch
      %72 = sbr.rel (0) target = $region33
    $region32: #{tpu_custom_call.1} parent=1 // pred_region
      _
    $region33: #{tpu_custom_call.1} parent=1 // pred_fallthru
      _
    // Predicated region
    $region34: #{tpu_custom_call.1} parent=1 // pred_check
      _
    $region35: #{tpu_custom_call.1} parent=1 // pred_check_branch
      %74 = sbr.rel (0) target = $region37
    $region36: #{tpu_custom_call.1} parent=1 // pred_region
      %75 = dma.done [#allocation3], 128
    $region37: #{tpu_custom_call.1} parent=1 // pred_fallthru
      _
    // Predicated region
    $region38: #{tpu_custom_call.1} parent=1 // pred_check
      _
    $region39: #{tpu_custom_call.1} parent=1 // pred_check_branch
      %77 = sbr.rel (0) target = $region41
    $region40: #{tpu_custom_call.1} parent=1 // pred_region
      %78 = dma.done [#allocation6], 1024
    $region41: #{tpu_custom_call.1} parent=1 // pred_fallthru
      _
    // Predicated region
    $region42: #{tpu_custom_call.1} parent=1 // pred_check
      _
    $region43: #{tpu_custom_call.1} parent=1 // pred_check_branch
      %80 = sbr.rel (0) target = $region45
    $region44: #{tpu_custom_call.1} parent=1 // pred_region
      %81 = dma.done [#allocation6], 1024
    $region45: #{tpu_custom_call.1} parent=1 // pred_fallthru
      _
    // Predicated region
    $region46: #{tpu_custom_call.1} parent=1 // pred_check
      _
    $region47: #{tpu_custom_call.1} parent=1 // pred_check_branch
      %83 = sbr.rel (0) target = $region49
    $region48: #{tpu_custom_call.1} parent=1 // pred_region
      %84 = dma.done [#allocation9], 1024
    $region49: #{tpu_custom_call.1} parent=1 // pred_fallthru
      _
    %v86 = vld [vmem:[#allocation2] sm:$0xf]
    %v87 = vld [vmem:[#allocation2 + $0x4] sm:$0xf]
    %v88 = vld [vmem:[#allocation5] sm:$0xf]
    %v89 = vld [vmem:[#allocation5 + $0x4] sm:$0xf]
    %v90 = vld [vmem:[#allocation5 + $0x8] sm:$0xf]
    %v91 = vld [vmem:[#allocation5 + $0xc] sm:$0xf]
    %v92 = vld [vmem:[#allocation5 + $0x10] sm:$0xf]
    %v93 = vld [vmem:[#allocation5 + $0x14] sm:$0xf]
    %v94 = vld [vmem:[#allocation5 + $0x18] sm:$0xf]
    %v95 = vld [vmem:[#allocation5 + $0x1c] sm:$0xf]
    %v96 = vld [vmem:[#allocation5 + $0x20] sm:$0xf]
    %v97 = vld [vmem:[#allocation5 + $0x24] sm:$0xf]
    %v98 = vld [vmem:[#allocation5 + $0x28] sm:$0xf]
    %v99 = vld [vmem:[#allocation5 + $0x2c] sm:$0xf]
    %v100 = vld [vmem:[#allocation5 + $0x30] sm:$0xf]
    %v101 = vld [vmem:[#allocation5 + $0x34] sm:$0xf]
    %v102 = vld [vmem:[#allocation5 + $0x38] sm:$0xf]
    %v103 = vld [vmem:[#allocation5 + $0x3c] sm:$0xf]
    %v104 = vld [vmem:[%s3] sm:$0x1]
    %v105 = vlaneseq
    %v106 = vshrl.u32 %v105, 7
    %v107 = vsub.s32 0, %v106
    %v108 = vrot.slane %v104, %v107
    %v111 = vunpack.c.l.b16 %v86
    %v112 = vunpack.c.l.b16 %v87
    %v113 = vpack.c.b16 %v112, %v111
    %v131 = vunpack.c.l.b16 %v88
    %v132 = vunpack.c.l.b16 %v89
    %v133 = vunpack.c.l.b16 %v90
    %v134 = vunpack.c.l.b16 %v91
    %v135 = vunpack.c.l.b16 %v92
    %v136 = vunpack.c.l.b16 %v93
    %v137 = vunpack.c.l.b16 %v94
    %v138 = vunpack.c.l.b16 %v95
    %v139 = vunpack.c.l.b16 %v96
    %v140 = vunpack.c.l.b16 %v97
    %v141 = vunpack.c.l.b16 %v98
    %v142 = vunpack.c.l.b16 %v99
    %v143 = vunpack.c.l.b16 %v100
    %v144 = vunpack.c.l.b16 %v101
    %v145 = vunpack.c.l.b16 %v102
    %v146 = vunpack.c.l.b16 %v103
    %v147 = vpack.c.b16 %v132, %v131
    %v148 = vpack.c.b16 %v134, %v133
    %v149 = vpack.c.b16 %v136, %v135
    %v150 = vpack.c.b16 %v138, %v137
    %v151 = vpack.c.b16 %v140, %v139
    %v152 = vpack.c.b16 %v142, %v141
    %v153 = vpack.c.b16 %v144, %v143
    %v154 = vpack.c.b16 %v146, %v145
    %163 = vmatprep.subr.bf16.mxu0 0
    %164 = vmatpush1.bf16.msra.mxu0 %v147
    %165 = vmatprep.subr.bf16.mxu0 0
    %166 = vmatpush1.bf16.msra.mxu0 %v148
    %167 = vmatprep.subr.bf16.mxu0 0
    %168 = vmatpush1.bf16.msra.mxu0 %v149
    %169 = vmatprep.subr.bf16.mxu0 0
    %170 = vmatpush1.bf16.msra.mxu0 %v150
    %171 = vmatprep.subr.bf16.mxu0 0
    %172 = vmatpush1.bf16.msra.mxu0 %v151
    %173 = vmatprep.subr.bf16.mxu0 0
    %174 = vmatpush1.bf16.msra.mxu0 %v152
    %175 = vmatprep.subr.bf16.mxu0 0
    %176 = vmatpush1.bf16.msra.mxu0 %v153
    %177 = vmatprep.subr.bf16.mxu0 0
    %178 = vmatpush1.bf16.msra.mxu0 %v154
    %179 = vmatprep.subr.bf16.mxu0 0
    %180 = vmatpush1.bf16.msra.mxu0 0
    %181 = vmatprep.subr.bf16.mxu0 0
    %182 = vmatpush1.bf16.msra.mxu0 0
    %183 = vmatprep.subr.bf16.mxu0 0
    %184 = vmatpush1.bf16.msra.mxu0 0
    %185 = vmatprep.subr.bf16.mxu0 0
    %186 = vmatpush1.bf16.msra.mxu0 0
    %187 = vmatprep.subr.bf16.mxu0 0
    %188 = vmatpush1.bf16.msra.mxu0 0
    %189 = vmatprep.subr.bf16.mxu0 0
    %190 = vmatpush1.bf16.msra.mxu0 0
    %191 = vmatprep.subr.bf16.mxu0 0
    %192 = vmatpush1.bf16.msra.mxu0 0
    %193 = vmatprep.subr.bf16.mxu0 0
    %194 = vmatpush1.bf16.msra.mxu0 0
    %195 = vmatprep.mubr.bf16.mxu0 0
    %196 = vmatmul.mubr.bf16.gmra.mrb[0].mxu0 %v113
    %v197 = vpop.f32.mrb[0].mxu0
    %v198 = vadd.f32 %v108, %v197
    %v199 = vpop.f32.mrb[0].mxu0
    %v200 = vpop.f32.mrb[0].mxu0
    %v201 = vadd.f32 %v108, %v200
    %v202 = vpop.f32.mrb[0].mxu0
    %203 = vdwg.mxu0
    %v204 = vmax.f32 %v198, 0.0
    %v205 = vmax.f32 %v201, 0.0
    %206 = vadd.xlane.f32.xlu0 %v204
    %v207 = vpop.xlane.xlu0 %206
    %208 = vadd.xlane.f32.xlu0 %v205
    %v209 = vpop.xlane.xlu0 %208
    %v210 = vmul.f32 %v207, 0.03125
    %v211 = vmul.f32 %v209, 0.03125
    %v212 = vmul.f32 %v204, %v204
    %v213 = vmul.f32 %v205, %v205
    %214 = vadd.xlane.f32.xlu0 %v212
    %v215 = vpop.xlane.xlu0 %214
    %216 = vadd.xlane.f32.xlu0 %v213
    %v217 = vpop.xlane.xlu0 %216
    %v218 = vmul.f32 %v215, 0.03125
    %v219 = vmul.f32 %v217, 0.03125
    %v220 = vmul.f32 %v210, %v210
    %v221 = vmul.f32 %v211, %v211
    %v222 = vsub.f32 %v218, %v220
    %v223 = vsub.f32 %v219, %v221
    %v224 = vmax.f32 %v222, 0.0
    %v225 = vmax.f32 %v223, 0.0
    %v226 = vsub.f32 %v204, %v210
    %v227 = vsub.f32 %v205, %v211
    %v228 = vadd.f32 %v224, 1e-05
    %v229 = vadd.f32 %v225, 1e-05
    %v230 = vrsqrt.pop %v228
    %v231 = vrsqrt.pop %v229
    %v232 = vmul.f32 %v226, %v230
    %v233 = vmul.f32 %v227, %v231
    %v234 = vld [vmem:[%s4] sm:$0x1]
    %v235 = vlaneseq
    %v236 = vshrl.u32 %v235, 7
    %v237 = vsub.s32 0, %v236
    %v238 = vrot.slane %v234, %v237
    %v239 = vmul.f32 %v232, %v238
    %v240 = vmul.f32 %v233, %v238
    %v241 = vld [vmem:[%s5] sm:$0x1]
    %v242 = vlaneseq
    %v243 = vshrl.u32 %v242, 7
    %v244 = vsub.s32 0, %v243
    %v245 = vrot.slane %v241, %v244
    %v246 = vadd.f32 %v239, %v245
    %v247 = vadd.f32 %v240, %v245
    %v248 = vpack.c.bf16 %v247, %v246
    %v249 = vld [vmem:[#allocation7] sm:$0xf]
    %v250 = vld [vmem:[#allocation7 + $0x4] sm:$0xf]
    %v251 = vld [vmem:[#allocation7 + $0x8] sm:$0xf]
    %v252 = vld [vmem:[#allocation7 + $0xc] sm:$0xf]
    %v253 = vld [vmem:[#allocation7 + $0x10] sm:$0xf]
    %v254 = vld [vmem:[#allocation7 + $0x14] sm:$0xf]
    %v255 = vld [vmem:[#allocation7 + $0x18] sm:$0xf]
    %v256 = vld [vmem:[#allocation7 + $0x1c] sm:$0xf]
    %v257 = vld [vmem:[#allocation7 + $0x20] sm:$0xf]
    %v258 = vld [vmem:[#allocation7 + $0x24] sm:$0xf]
    %v259 = vld [vmem:[#allocation7 + $0x28] sm:$0xf]
    %v260 = vld [vmem:[#allocation7 + $0x2c] sm:$0xf]
    %v261 = vld [vmem:[#allocation7 + $0x30] sm:$0xf]
    %v262 = vld [vmem:[#allocation7 + $0x34] sm:$0xf]
    %v263 = vld [vmem:[#allocation7 + $0x38] sm:$0xf]
    %v264 = vld [vmem:[#allocation7 + $0x3c] sm:$0xf]
    %v265 = vld [vmem:[%s3 + $0x1] sm:$0x1]
    %v266 = vlaneseq
    %v267 = vshrl.u32 %v266, 7
    %v268 = vsub.s32 0, %v267
    %v269 = vrot.slane %v265, %v268
    %v286 = vunpack.c.l.b16 %v249
    %v287 = vunpack.c.l.b16 %v250
    %v288 = vunpack.c.l.b16 %v251
    %v289 = vunpack.c.l.b16 %v252
    %v290 = vunpack.c.l.b16 %v253
    %v291 = vunpack.c.l.b16 %v254
    %v292 = vunpack.c.l.b16 %v255
    %v293 = vunpack.c.l.b16 %v256
    %v294 = vunpack.c.l.b16 %v257
    %v295 = vunpack.c.l.b16 %v258
    %v296 = vunpack.c.l.b16 %v259
    %v297 = vunpack.c.l.b16 %v260
    %v298 = vunpack.c.l.b16 %v261
    %v299 = vunpack.c.l.b16 %v262
    %v300 = vunpack.c.l.b16 %v263
    %v301 = vunpack.c.l.b16 %v264
    %v302 = vpack.c.b16 %v287, %v286
    %v303 = vpack.c.b16 %v289, %v288
    %v304 = vpack.c.b16 %v291, %v290
    %v305 = vpack.c.b16 %v293, %v292
    %v306 = vpack.c.b16 %v295, %v294
    %v307 = vpack.c.b16 %v297, %v296
    %v308 = vpack.c.b16 %v299, %v298
    %v309 = vpack.c.b16 %v301, %v300
    %318 = vmatprep.subr.bf16.mxu0 0
    %319 = vmatpush1.bf16.msra.mxu0 %v302
    %320 = vmatprep.subr.bf16.mxu0 0
    %321 = vmatpush1.bf16.msra.mxu0 %v303
    %322 = vmatprep.subr.bf16.mxu0 0
    %323 = vmatpush1.bf16.msra.mxu0 %v304
    %324 = vmatprep.subr.bf16.mxu0 0
    %325 = vmatpush1.bf16.msra.mxu0 %v305
    %326 = vmatprep.subr.bf16.mxu0 0
    %327 = vmatpush1.bf16.msra.mxu0 %v306
    %328 = vmatprep.subr.bf16.mxu0 0
    %329 = vmatpush1.bf16.msra.mxu0 %v307
    %330 = vmatprep.subr.bf16.mxu0 0
    %331 = vmatpush1.bf16.msra.mxu0 %v308
    %332 = vmatprep.subr.bf16.mxu0 0
    %333 = vmatpush1.bf16.msra.mxu0 %v309
    %334 = vmatprep.subr.bf16.mxu0 0
    %335 = vmatpush1.bf16.msra.mxu0 0
    %336 = vmatprep.subr.bf16.mxu0 0
    %337 = vmatpush1.bf16.msra.mxu0 0
    %338 = vmatprep.subr.bf16.mxu0 0
    %339 = vmatpush1.bf16.msra.mxu0 0
    %340 = vmatprep.subr.bf16.mxu0 0
    %341 = vmatpush1.bf16.msra.mxu0 0
    %342 = vmatprep.subr.bf16.mxu0 0
    %343 = vmatpush1.bf16.msra.mxu0 0
    %344 = vmatprep.subr.bf16.mxu0 0
    %345 = vmatpush1.bf16.msra.mxu0 0
    %346 = vmatprep.subr.bf16.mxu0 0
    %347 = vmatpush1.bf16.msra.mxu0 0
    %348 = vmatprep.subr.bf16.mxu0 0
    %349 = vmatpush1.bf16.msra.mxu0 0
    %350 = vmatprep.mubr.bf16.mxu0 0
    %351 = vmatmul.mubr.bf16.gmra.mrb[0].mxu0 %v248
    %v352 = vpop.f32.mrb[0].mxu0
    %v353 = vadd.f32 %v269, %v352
    %v354 = vpop.f32.mrb[0].mxu0
    %v355 = vpop.f32.mrb[0].mxu0
    %v356 = vadd.f32 %v269, %v355
    %v357 = vpop.f32.mrb[0].mxu0
    %358 = vdwg.mxu0
    %v359 = vmax.f32 %v353, 0.0
    %v360 = vmax.f32 %v356, 0.0
    %361 = vadd.xlane.f32.xlu0 %v359
    %v362 = vpop.xlane.xlu0 %361
    %363 = vadd.xlane.f32.xlu0 %v360
    %v364 = vpop.xlane.xlu0 %363
    %v365 = vmul.f32 %v362, 0.03125
    %v366 = vmul.f32 %v364, 0.03125
    %v367 = vmul.f32 %v359, %v359
    %v368 = vmul.f32 %v360, %v360
    %369 = vadd.xlane.f32.xlu0 %v367
    %v370 = vpop.xlane.xlu0 %369
    %371 = vadd.xlane.f32.xlu0 %v368
    %v372 = vpop.xlane.xlu0 %371
    %v373 = vmul.f32 %v370, 0.03125
    %v374 = vmul.f32 %v372, 0.03125
    %v375 = vmul.f32 %v365, %v365
    %v376 = vmul.f32 %v366, %v366
    %v377 = vsub.f32 %v373, %v375
    %v378 = vsub.f32 %v374, %v376
    %v379 = vmax.f32 %v377, 0.0
    %v380 = vmax.f32 %v378, 0.0
    %v381 = vsub.f32 %v359, %v365
    %v382 = vsub.f32 %v360, %v366
    %v383 = vadd.f32 %v379, 1e-05
    %v384 = vadd.f32 %v380, 1e-05
    %v385 = vrsqrt.pop %v383
    %v386 = vrsqrt.pop %v384
    %v387 = vmul.f32 %v381, %v385
    %v388 = vmul.f32 %v382, %v386
    %v389 = vld [vmem:[%s4 + $0x1] sm:$0x1]
    %v390 = vlaneseq
    %v391 = vshrl.u32 %v390, 7
    %v392 = vsub.s32 0, %v391
    %v393 = vrot.slane %v389, %v392
    %v394 = vmul.f32 %v387, %v393
    %v395 = vmul.f32 %v388, %v393
    %v396 = vld [vmem:[%s5 + $0x1] sm:$0x1]
    %v397 = vlaneseq
    %v398 = vshrl.u32 %v397, 7
    %v399 = vsub.s32 0, %v398
    %v400 = vrot.slane %v396, %v399
    %v401 = vadd.f32 %v394, %v400
    %v402 = vadd.f32 %v395, %v400
    %v403 = vpack.c.bf16 %v402, %v401
    %v404 = vld [vmem:[#allocation8] sm:$0xf]
    %v405 = vld [vmem:[#allocation8 + $0x4] sm:$0xf]
    %v406 = vld [vmem:[#allocation8 + $0x8] sm:$0xf]
    %v407 = vld [vmem:[#allocation8 + $0xc] sm:$0xf]
    %v408 = vld [vmem:[#allocation8 + $0x10] sm:$0xf]
    %v409 = vld [vmem:[#allocation8 + $0x14] sm:$0xf]
    %v410 = vld [vmem:[#allocation8 + $0x18] sm:$0xf]
    %v411 = vld [vmem:[#allocation8 + $0x1c] sm:$0xf]
    %v412 = vld [vmem:[#allocation8 + $0x20] sm:$0xf]
    %v413 = vld [vmem:[#allocation8 + $0x24] sm:$0xf]
    %v414 = vld [vmem:[#allocation8 + $0x28] sm:$0xf]
    %v415 = vld [vmem:[#allocation8 + $0x2c] sm:$0xf]
    %v416 = vld [vmem:[#allocation8 + $0x30] sm:$0xf]
    %v417 = vld [vmem:[#allocation8 + $0x34] sm:$0xf]
    %v418 = vld [vmem:[#allocation8 + $0x38] sm:$0xf]
    %v419 = vld [vmem:[#allocation8 + $0x3c] sm:$0xf]
    %v420 = vld [vmem:[%s7] sm:$0x1]
    %v422 = vlaneseq
    %v423 = vshrl.u32 %v422, 7
    %v424 = vsub.s32 0, %v423
    %v425 = vrot.slane %v420, %v424
    %v443 = vunpack.c.l.b16 %v404
    %v444 = vunpack.c.l.b16 %v405
    %v445 = vunpack.c.l.b16 %v406
    %v446 = vunpack.c.l.b16 %v407
    %v447 = vunpack.c.l.b16 %v408
    %v448 = vunpack.c.l.b16 %v409
    %v449 = vunpack.c.l.b16 %v410
    %v450 = vunpack.c.l.b16 %v411
    %v451 = vunpack.c.l.b16 %v412
    %v452 = vunpack.c.l.b16 %v413
    %v453 = vunpack.c.l.b16 %v414
    %v454 = vunpack.c.l.b16 %v415
    %v455 = vunpack.c.l.b16 %v416
    %v456 = vunpack.c.l.b16 %v417
    %v457 = vunpack.c.l.b16 %v418
    %v458 = vunpack.c.l.b16 %v419
    %v459 = vpack.c.b16 %v444, %v443
    %v460 = vpack.c.b16 %v446, %v445
    %v461 = vpack.c.b16 %v448, %v447
    %v462 = vpack.c.b16 %v450, %v449
    %v463 = vpack.c.b16 %v452, %v451
    %v464 = vpack.c.b16 %v454, %v453
    %v465 = vpack.c.b16 %v456, %v455
    %v466 = vpack.c.b16 %v458, %v457
    %475 = vmatprep.subr.bf16.mxu0 0
    %476 = vmatpush1.bf16.msra.mxu0 %v459
    %477 = vmatprep.subr.bf16.mxu0 0
    %478 = vmatpush1.bf16.msra.mxu0 %v460
    %479 = vmatprep.subr.bf16.mxu0 0
    %480 = vmatpush1.bf16.msra.mxu0 %v461
    %481 = vmatprep.subr.bf16.mxu0 0
    %482 = vmatpush1.bf16.msra.mxu0 %v462
    %483 = vmatprep.subr.bf16.mxu0 0
    %484 = vmatpush1.bf16.msra.mxu0 %v463
    %485 = vmatprep.subr.bf16.mxu0 0
    %486 = vmatpush1.bf16.msra.mxu0 %v464
    %487 = vmatprep.subr.bf16.mxu0 0
    %488 = vmatpush1.bf16.msra.mxu0 %v465
    %489 = vmatprep.subr.bf16.mxu0 0
    %490 = vmatpush1.bf16.msra.mxu0 %v466
    %491 = vmatprep.subr.bf16.mxu0 0
    %492 = vmatpush1.bf16.msra.mxu0 0
    %493 = vmatprep.subr.bf16.mxu0 0
    %494 = vmatpush1.bf16.msra.mxu0 0
    %495 = vmatprep.subr.bf16.mxu0 0
    %496 = vmatpush1.bf16.msra.mxu0 0
    %497 = vmatprep.subr.bf16.mxu0 0
    %498 = vmatpush1.bf16.msra.mxu0 0
    %499 = vmatprep.subr.bf16.mxu0 0
    %500 = vmatpush1.bf16.msra.mxu0 0
    %501 = vmatprep.subr.bf16.mxu0 0
    %502 = vmatpush1.bf16.msra.mxu0 0
    %503 = vmatprep.subr.bf16.mxu0 0
    %504 = vmatpush1.bf16.msra.mxu0 0
    %505 = vmatprep.subr.bf16.mxu0 0
    %506 = vmatpush1.bf16.msra.mxu0 0
    %507 = vmatprep.mubr.bf16.mxu0 0
    %508 = vmatmul.mubr.bf16.gmra.mrb[0].mxu0 %v403
    %v509 = vpop.f32.mrb[0].mxu0
    %v510 = vadd.f32 %v425, %v509
    %v511 = vpop.f32.mrb[0].mxu0
    %v512 = vpop.f32.mrb[0].mxu0
    %v513 = vadd.f32 %v425, %v512
    %v514 = vpop.f32.mrb[0].mxu0
    %515 = vdwg.mxu0
    %516 = vst [vmem:[#allocation10] sm:$0xff] %v510
    %517 = vst [vmem:[#allocation10 + $0x8] sm:$0xff] %v513
    // Predicated region
    $region50: #{tpu_custom_call.1} parent=1 // pred_check
      _
    $region51: #{tpu_custom_call.1} parent=1 // pred_check_branch
      %519 = sbr.rel (0) target = $region53
    $region52: #{tpu_custom_call.1} parent=1 // pred_region
      %s521 = ssub.s32 256, 256
      %522 = vsyncadd [#allocation4], %s521
      %s523 = sshll.u32 [#allocation10], 4
      %s524 = int_to_ptr.vmem [resolvable:$true] %s523
      %529 = dma.vmem_to_hbm [thread:$0]  %s524, 256, %s8, [#allocation4], 128, 128, 8
    $region53: #{tpu_custom_call.1} parent=1 // pred_fallthru
      _
    // Predicated region
    $region54: #{tpu_custom_call.1} parent=1 // pred_check
      _
    $region55: #{tpu_custom_call.1} parent=1 // pred_check_branch
      %531 = sbr.rel (0) target = $region57
    $region56: #{tpu_custom_call.1} parent=1 // pred_region
      %532 = dma.done [#allocation4], 256
    $region57: #{tpu_custom_call.1} parent=1 // pred_fallthru
      _
    %533 = vsyncpa [#allocation3], 1
    %534 = vsyncpa [#allocation6], 1
    %535 = vsyncpa [#allocation9], 1
    %536 = vsyncpa [#allocation4], 1

</llo_original>
